<compile_context>
chip_gen: v6e
topology: v6e:2x2x1
jax: 0.10.0
libtpu: 0.0.40
codegen_flags: <defaults>
</compile_context>

<pallas_src>
import functools
import math

import jax
import jax.numpy as jnp
from jax.experimental import pallas as pl
from jax.experimental.pallas import tpu as pltpu


def _pure_conv_net_kernel(x_ref, w1_ref, b1_ref, w2_ref, b2_ref, o_ref, *, pooling):
    # x_ref : (TB, C_in, HW)    one batch tile; HW is in the 128-lane dim
    # w1_ref: (C_in, C_mid, 1)  conv1 weight, laid out for broadcast-FMA
    # b1_ref: (C_mid, 1)
    # w2_ref: (C_mid, T)        conv2 weight (pre-scaled by 1/(H*W) if 'average')
    # b2_ref: (1, T)
    # o_ref : (TB, T)
    x = x_ref[...]                                   # (TB, C_in, HW), f32
    c_in = x_ref.shape[1]

    # Conv1 (1x1) as a VPU broadcast-FMA over the tiny input-channel axis:
    #   h[b, m, hw] = relu( sum_c x[b, c, hw] * w1[c, m] + b1[m] )
    acc = x[:, 0:1, :] * w1_ref[0]                   # (TB, C_mid, HW)
    for c in range(1, c_in):                         # static unroll, C_in is small
        acc = acc + x[:, c:c + 1, :] * w1_ref[c]
    h = jnp.maximum(acc + b1_ref[...], 0.0)          # (TB, C_mid, HW)

    if pooling == "average":
        # Mean over H*W commutes with the linear conv2; 1/(H*W) is already
        # folded into w2, so a plain lane-sum (XLU) suffices here.
        pooled = jnp.sum(h, axis=2)                  # (TB, C_mid)
        y = jnp.dot(pooled, w2_ref[...],
                    preferred_element_type=jnp.float32) + b2_ref[...]
    else:
        # 'max' pooling: the pool does NOT commute with conv2, keep original order.
        y_full = jnp.einsum("bmh,mt->bht", h, w2_ref[...],
                            preferred_element_type=jnp.float32) + b2_ref[...][None]
        y = jnp.max(y_full, axis=1)                  # (TB, T)

    o_ref[...] = jax.nn.sigmoid(y).astype(o_ref.dtype)


def pure_conv_net_forward(x_nchw, w1, b1, w2, b2, pooling="average", batch_block=64):
    """x_nchw: (B, C_in, H, W) float32. Returns (B, num_targets) float32."""
    B, c_in, H, W = x_nchw.shape
    c_mid = w1.shape[1]
    num_targets = w2.shape[1]
    HW = H * W

    # Free reshape (no transpose, no extra HBM pass): NCHW -> (B, C_in, H*W).
    x = x_nchw.reshape(B, c_in, HW)

    # Per-grid-step batch tile: a multiple of 8 (sublane), capped by batch_block,
    # and split into >=2 grid steps when B is large enough (v7x megacore).
    batch_block = max(8, (batch_block // 8) * 8)
    tb = max(8, min(batch_block, 8 * pl.cdiv(B, 8)))
    if pl.cdiv(B, tb) < 2 and B > 8:
        tb = max(8, 8 * pl.cdiv(pl.cdiv(B, 2), 8))
    grid_b = pl.cdiv(B, tb)
    B_pad = grid_b * tb
    if B_pad != B:
        x = jnp.pad(x, ((0, B_pad - B), (0, 0), (0, 0)))

    # Weight layouts for the in-kernel broadcast-FMA; fold the average-pool
    # 1/(H*W) scale into w2 so no per-output divide is needed in the kernel.
    w1_k = w1.reshape(c_in, c_mid, 1)
    b1_k = b1.reshape(c_mid, 1)
    w2_k = (w2 * (1.0 / HW)) if pooling == "average" else w2
    b2_k = b2.reshape(1, num_targets)

    kernel = functools.partial(_pure_conv_net_kernel, pooling=pooling)

    out = pl.pallas_call(
        kernel,
        out_shape=jax.ShapeDtypeStruct((B_pad, num_targets), jnp.float32),
        grid=(grid_b,),
        in_specs=[
            pl.BlockSpec((tb, c_in, HW), lambda b: (b, 0, 0)),
            pl.BlockSpec((c_in, c_mid, 1), lambda b: (0, 0, 0)),
            pl.BlockSpec((c_mid, 1), lambda b: (0, 0)),
            pl.BlockSpec((c_mid, num_targets), lambda b: (0, 0)),
            pl.BlockSpec((1, num_targets), lambda b: (0, 0)),
        ],
        out_specs=pl.BlockSpec((tb, num_targets), lambda b: (b, 0)),
        compiler_params=pltpu.CompilerParams(
            dimension_semantics=("parallel",),
            vmem_limit_bytes=32 * 1024 * 1024,
        ),
    )(x, w1_k, b1_k, w2_k, b2_k)

    return out[:B]


def init_params(key, num_features, num_targets, intermediate_size=32, kernel_size=1):
    """Deterministic PyTorch-style Conv2d init (kaiming-uniform-ish bounds).

    Conv2d weight (C_out, C_in, 1, 1) is stored directly as the equivalent
    matmul weight of shape (C_in, C_out).
    """
    k1, k2, k3, k4 = jax.random.split(key, 4)
    fan_in1 = num_features * kernel_size * kernel_size
    fan_in2 = intermediate_size * kernel_size * kernel_size
    bound1 = 1.0 / math.sqrt(fan_in1)
    bound2 = 1.0 / math.sqrt(fan_in2)
    w1 = jax.random.uniform(k1, (num_features, intermediate_size), jnp.float32,
                            minval=-bound1, maxval=bound1)
    b1 = jax.random.uniform(k2, (1, intermediate_size), jnp.float32,
                            minval=-bound1, maxval=bound1)
    w2 = jax.random.uniform(k3, (intermediate_size, num_targets), jnp.float32,
                            minval=-bound2, maxval=bound2)
    b2 = jax.random.uniform(k4, (1, num_targets), jnp.float32,
                            minval=-bound2, maxval=bound2)
    return w1, b1, w2, b2


def _reference_forward(x_nchw, w1, b1, w2, b2, pooling="average"):
    """Pure-JAX reference replicating the PyTorch NCHW 1x1-conv pipeline."""
    h = jnp.einsum("bchw,cm->bmhw", x_nchw, w1) + b1[0][None, :, None, None]
    h = jnp.maximum(h, 0.0)
    y = jnp.einsum("bmhw,mt->bthw", h, w2) + b2[0][None, :, None, None]
    if pooling == "average":
        pooled = jnp.mean(y, axis=(2, 3))
    else:
        pooled = jnp.max(y, axis=(2, 3))
    return jax.nn.sigmoid(pooled)


if __name__ == "__main__":
    B, C_IN, H, W = 2, 4, 16, 16
    NUM_TARGETS = 8
    INTERMEDIATE = 32

    key = jax.random.PRNGKey(0)
    kx, kp = jax.random.split(key)
    x = jax.random.normal(kx, (B, C_IN, H, W), jnp.float32)
    w1, b1, w2, b2 = init_params(kp, C_IN, NUM_TARGETS, INTERMEDIATE)

    out = pure_conv_net_forward(x, w1, b1, w2, b2, pooling="average")
    out = jax.block_until_ready(out)

    ref = _reference_forward(x, w1, b1, w2, b2, pooling="average")
    assert out.shape == (B, NUM_TARGETS)
    assert jnp.allclose(out, ref, atol=1e-5, rtol=1e-5), "mismatch vs JAX reference"

    print("KERNEL_OK")
</pallas_src>

<mosaic_0001>
module attributes {stable_mosaic.version = 11 : i64} {
  func.func @_pure_conv_net_kernel(%arg0: i32, %arg1: memref<8x4x256xf32, #tpu.memory_space<vmem>>, %arg2: memref<4x32x1xf32, #tpu.memory_space<vmem>>, %arg3: memref<32x1xf32, #tpu.memory_space<vmem>>, %arg4: memref<32x8xf32, #tpu.memory_space<vmem>>, %arg5: memref<1x8xf32, #tpu.memory_space<vmem>>, %arg6: memref<8x8xf32, #tpu.memory_space<vmem>>) attributes {dimension_semantics = [#tpu.dimension_semantics<parallel>], iteration_bounds = array<i64: 1>, scalar_prefetch = 0 : i64, scratch_operands = 0 : i64, tpu.core_type = #tpu.core_type<tc>, window_params = [{transform_indices = @transform_0, window_bounds = array<i64: 8, 4, 256>}, {pipeline_mode = #tpu.pipeline_mode<synchronous>, transform_indices = @transform_1, window_bounds = array<i64: 4, 32, 1>}, {pipeline_mode = #tpu.pipeline_mode<synchronous>, transform_indices = @transform_2, window_bounds = array<i64: 32, 1>}, {pipeline_mode = #tpu.pipeline_mode<synchronous>, transform_indices = @transform_3, window_bounds = array<i64: 32, 8>}, {pipeline_mode = #tpu.pipeline_mode<synchronous>, transform_indices = @transform_4, window_bounds = array<i64: 1, 8>}, {transform_indices = @transform_5, window_bounds = array<i64: 8, 8>}]} {
    %c0 = arith.constant 0 : index
    %c0_0 = arith.constant 0 : index
    %c0_1 = arith.constant 0 : index
    %0 = vector.load %arg1[%c0, %c0_0, %c0_1] : memref<8x4x256xf32, #tpu.memory_space<vmem>>, vector<8x4x256xf32>
    %1 = vector.extract_strided_slice %0 {offsets = [0, 0, 0], sizes = [8, 1, 256], strides = [1, 1, 1]} : vector<8x4x256xf32> to vector<8x1x256xf32>
    %c0_2 = arith.constant 0 : index
    %c0_3 = arith.constant 0 : index
    %c0_4 = arith.constant 0 : index
    %2 = vector.load %arg2[%c0_2, %c0_3, %c0_4] : memref<4x32x1xf32, #tpu.memory_space<vmem>>, vector<1x32x1xf32>
    %3 = vector.shape_cast %2 : vector<1x32x1xf32> to vector<32x1xf32>
    %4 = vector.shape_cast %3 : vector<32x1xf32> to vector<1x32x1xf32>
    %5 = vector.broadcast %1 : vector<8x1x256xf32> to vector<8x32x256xf32>
    %6 = vector.broadcast %4 : vector<1x32x1xf32> to vector<8x32x256xf32>
    %7 = arith.mulf %5, %6 : vector<8x32x256xf32>
    %8 = vector.extract_strided_slice %0 {offsets = [0, 1, 0], sizes = [8, 1, 256], strides = [1, 1, 1]} : vector<8x4x256xf32> to vector<8x1x256xf32>
    %c1 = arith.constant 1 : index
    %c0_5 = arith.constant 0 : index
    %c0_6 = arith.constant 0 : index
    %9 = vector.load %arg2[%c1, %c0_5, %c0_6] : memref<4x32x1xf32, #tpu.memory_space<vmem>>, vector<1x32x1xf32>
    %10 = vector.shape_cast %9 : vector<1x32x1xf32> to vector<32x1xf32>
    %11 = vector.shape_cast %10 : vector<32x1xf32> to vector<1x32x1xf32>
    %12 = vector.broadcast %8 : vector<8x1x256xf32> to vector<8x32x256xf32>
    %13 = vector.broadcast %11 : vector<1x32x1xf32> to vector<8x32x256xf32>
    %14 = arith.mulf %12, %13 : vector<8x32x256xf32>
    %15 = arith.addf %7, %14 : vector<8x32x256xf32>
    %16 = vector.extract_strided_slice %0 {offsets = [0, 2, 0], sizes = [8, 1, 256], strides = [1, 1, 1]} : vector<8x4x256xf32> to vector<8x1x256xf32>
    %c2 = arith.constant 2 : index
    %c0_7 = arith.constant 0 : index
    %c0_8 = arith.constant 0 : index
    %17 = vector.load %arg2[%c2, %c0_7, %c0_8] : memref<4x32x1xf32, #tpu.memory_space<vmem>>, vector<1x32x1xf32>
    %18 = vector.shape_cast %17 : vector<1x32x1xf32> to vector<32x1xf32>
    %19 = vector.shape_cast %18 : vector<32x1xf32> to vector<1x32x1xf32>
    %20 = vector.broadcast %16 : vector<8x1x256xf32> to vector<8x32x256xf32>
    %21 = vector.broadcast %19 : vector<1x32x1xf32> to vector<8x32x256xf32>
    %22 = arith.mulf %20, %21 : vector<8x32x256xf32>
    %23 = arith.addf %15, %22 : vector<8x32x256xf32>
    %24 = vector.extract_strided_slice %0 {offsets = [0, 3, 0], sizes = [8, 1, 256], strides = [1, 1, 1]} : vector<8x4x256xf32> to vector<8x1x256xf32>
    %c3 = arith.constant 3 : index
    %c0_9 = arith.constant 0 : index
    %c0_10 = arith.constant 0 : index
    %25 = vector.load %arg2[%c3, %c0_9, %c0_10] : memref<4x32x1xf32, #tpu.memory_space<vmem>>, vector<1x32x1xf32>
    %26 = vector.shape_cast %25 : vector<1x32x1xf32> to vector<32x1xf32>
    %27 = vector.shape_cast %26 : vector<32x1xf32> to vector<1x32x1xf32>
    %28 = vector.broadcast %24 : vector<8x1x256xf32> to vector<8x32x256xf32>
    %29 = vector.broadcast %27 : vector<1x32x1xf32> to vector<8x32x256xf32>
    %30 = arith.mulf %28, %29 : vector<8x32x256xf32>
    %31 = arith.addf %23, %30 : vector<8x32x256xf32>
    %c0_11 = arith.constant 0 : index
    %c0_12 = arith.constant 0 : index
    %32 = vector.load %arg3[%c0_11, %c0_12] : memref<32x1xf32, #tpu.memory_space<vmem>>, vector<32x1xf32>
    %33 = vector.shape_cast %32 : vector<32x1xf32> to vector<1x32x1xf32>
    %34 = vector.broadcast %33 : vector<1x32x1xf32> to vector<8x32x256xf32>
    %35 = arith.addf %31, %34 : vector<8x32x256xf32>
    %cst = arith.constant 0.000000e+00 : f32
    %36 = vector.broadcast %cst : f32 to vector<8x32x256xf32>
    %37 = arith.maximumf %35, %36 : vector<8x32x256xf32>
    %cst_13 = arith.constant dense<0.000000e+00> : vector<8x32xf32>
    %38 = vector.multi_reduction <add>, %37, %cst_13 [2] : vector<8x32x256xf32> to vector<8x32xf32>
    %c0_14 = arith.constant 0 : index
    %c0_15 = arith.constant 0 : index
    %39 = vector.load %arg4[%c0_14, %c0_15] : memref<32x8xf32, #tpu.memory_space<vmem>>, vector<32x8xf32>
    %cst_16 = arith.constant dense<0.000000e+00> : vector<8x8xf32>
    %40 = tpu.matmul %38, %39, %cst_16 {dimension_numbers = #tpu.dot_dimension_numbers<[1], [0], [0], [1], [0, 0, 1, 1], [], []>} : vector<8x32xf32>, vector<32x8xf32>, vector<8x8xf32> -> vector<8x8xf32>
    %c0_17 = arith.constant 0 : index
    %c0_18 = arith.constant 0 : index
    %41 = vector.load %arg5[%c0_17, %c0_18] : memref<1x8xf32, #tpu.memory_space<vmem>>, vector<1x8xf32>
    %42 = vector.broadcast %41 : vector<1x8xf32> to vector<8x8xf32>
    %43 = arith.addf %40, %42 : vector<8x8xf32>
    %44 = arith.negf %43 : vector<8x8xf32>
    %45 = math.exp %44 : vector<8x8xf32>
    %cst_19 = arith.constant 1.000000e+00 : f32
    %46 = vector.broadcast %cst_19 : f32 to vector<8x8xf32>
    %47 = arith.addf %46, %45 : vector<8x8xf32>
    %48 = arith.divf %46, %47 : vector<8x8xf32>
    %c0_20 = arith.constant 0 : index
    %c0_21 = arith.constant 0 : index
    %49 = vector.load %arg6[%c0_20, %c0_21] : memref<8x8xf32, #tpu.memory_space<vmem>>, vector<8x8xf32>
    tpu.vector_store %arg6[%c0_20, %c0_21], %48 {strides = array<i32>} : memref<8x8xf32, #tpu.memory_space<vmem>>, vector<8x8xf32>,
    return
  }
  func.func @transform_0(%arg0: i32) -> (i32, i32, i32) {
    %c0_i32 = arith.constant 0 : i32
    %c0_i32_0 = arith.constant 0 : i32
    %c0_i32_1 = arith.constant 0 : i32
    return %arg0, %c0_i32, %c0_i32_0 : i32, i32, i32
  }
  func.func @transform_1(%arg0: i32) -> (i32, i32, i32) {
    %c0_i32 = arith.constant 0 : i32
    %c0_i32_0 = arith.constant 0 : i32
    %c0_i32_1 = arith.constant 0 : i32
    %c0_i32_2 = arith.constant 0 : i32
    return %c0_i32, %c0_i32_0, %c0_i32_1 : i32, i32, i32
  }
  func.func @transform_2(%arg0: i32) -> (i32, i32) {
    %c0_i32 = arith.constant 0 : i32
    %c0_i32_0 = arith.constant 0 : i32
    %c0_i32_1 = arith.constant 0 : i32
    return %c0_i32, %c0_i32_0 : i32, i32
  }
  func.func @transform_3(%arg0: i32) -> (i32, i32) {
    %c0_i32 = arith.constant 0 : i32
    %c0_i32_0 = arith.constant 0 : i32
    %c0_i32_1 = arith.constant 0 : i32
    return %c0_i32, %c0_i32_0 : i32, i32
  }
  func.func @transform_4(%arg0: i32) -> (i32, i32) {
    %c0_i32 = arith.constant 0 : i32
    %c0_i32_0 = arith.constant 0 : i32
    %c0_i32_1 = arith.constant 0 : i32
    return %c0_i32, %c0_i32_0 : i32, i32
  }
  func.func @transform_5(%arg0: i32) -> (i32, i32) {
    %c0_i32 = arith.constant 0 : i32
    %c0_i32_0 = arith.constant 0 : i32
    return %arg0, %c0_i32 : i32, i32
  }
}

</mosaic_0001>

<llo_original>
// kernel: tpu_custom_call.1
$region0: #{tpu_custom_call.1}
  #allocation0 [shape = 'u32[]', space=smem, size = 0x4, offset = 0x4, fixed_abs, tag = 'smem constant byte address 0x4 - core index']
  #allocation1 [shape = 'u32[144,128]{1,0:T(1,128)}', space=vmem, size = 0x12000, scoped, tag = 'internal scratch']
  %s0 = inlined_call_operand.vmem [shape: f32[8,4,256], index: 0, kind: input, shape index: {}]
  %s1 = inlined_call_operand.vmem [shape: f32[4,32,1], index: 1, kind: input, shape index: {}]
  %s2 = inlined_call_operand.vmem [shape: f32[32,1], index: 2, kind: input, shape index: {}]
  %s3 = inlined_call_operand.vmem [shape: f32[32,8], index: 3, kind: input, shape index: {}]
  %s4 = inlined_call_operand.vmem [shape: f32[1,8], index: 4, kind: input, shape index: {}]
  %s5 = inlined_call_operand.hbm [shape: f32[8,8], index: 5, kind: output, shape index: {}]
  %s6 = sld [smem:[#allocation0]]
  $region30: #{tpu_custom_call.1} parent=0
    _
  %s8 = ssub.s32 1, %s6
  %s9 = scalar_select 0, %s8, %s6
  $region1: #{tpu_custom_call.1} parent=0
    #allocation2 [shape = 'u8[4096]{0}', space=vmem, size = 0x1000, scoped, tag = 'output window, operand 0, single buffered']
    #allocation3 [shape = 's32[1]{0}', space=sflag, size = 0x4, scoped, tag = 'scoped memory for tpu_custom_call.1']
    %10 = vsyncpa [#allocation3], 0
    // Predicated region
    $region2: #{tpu_custom_call.1} parent=1 // pred_check
      _
    $region3: #{tpu_custom_call.1} parent=1 // pred_check_branch
      %12 = sbr.rel (0) target = $region5
    $region4: #{tpu_custom_call.1} parent=1 // pred_region
      _
    $region5: #{tpu_custom_call.1} parent=1 // pred_fallthru
      _
    // Predicated region
    $region6: #{tpu_custom_call.1} parent=1 // pred_check
      _
    $region7: #{tpu_custom_call.1} parent=1 // pred_check_branch
      %14 = sbr.rel (0) target = $region9
    $region8: #{tpu_custom_call.1} parent=1 // pred_region
      _
    $region9: #{tpu_custom_call.1} parent=1 // pred_fallthru
      _
    // Predicated region
    $region10: #{tpu_custom_call.1} parent=1 // pred_check
      _
    $region11: #{tpu_custom_call.1} parent=1 // pred_check_branch
      %16 = sbr.rel (0) target = $region13
    $region12: #{tpu_custom_call.1} parent=1 // pred_region
      _
    $region13: #{tpu_custom_call.1} parent=1 // pred_fallthru
      _
    // Predicated region
    $region14: #{tpu_custom_call.1} parent=1 // pred_check
      _
    $region15: #{tpu_custom_call.1} parent=1 // pred_check_branch
      %18 = sbr.rel (0) target = $region17
    $region16: #{tpu_custom_call.1} parent=1 // pred_region
      _
    $region17: #{tpu_custom_call.1} parent=1 // pred_fallthru
      _
    // Predicated region
    $region18: #{tpu_custom_call.1} parent=1 // pred_check
      _
    $region19: #{tpu_custom_call.1} parent=1 // pred_check_branch
      %20 = sbr.rel (0) target = $region21
    $region20: #{tpu_custom_call.1} parent=1 // pred_region
      _
    $region21: #{tpu_custom_call.1} parent=1 // pred_fallthru
      _
    %v21 = vld [vmem:[%s0] sm:$0xff]
    %v22 = vld [vmem:[%s0 + $0x8] sm:$0xff]
    %v23 = vld [vmem:[%s0 + $0x10] sm:$0xff]
    %v24 = vld [vmem:[%s0 + $0x18] sm:$0xff]
    %v25 = vld [vmem:[%s0 + $0x20] sm:$0xff]
    %v26 = vld [vmem:[%s0 + $0x28] sm:$0xff]
    %v27 = vld [vmem:[%s0 + $0x30] sm:$0xff]
    %v28 = vld [vmem:[%s0 + $0x38] sm:$0xff]
    %v29 = vld [vmem:[%s1] sm:$0xff]
    %v30 = vld [vmem:[%s1 + $0x8] sm:$0xff]
    %v31 = vld [vmem:[%s1 + $0x10] sm:$0xff]
    %v32 = vld [vmem:[%s1 + $0x18] sm:$0xff]
    %v41 = vlaneseq
    %v42 = vshrl.u32 %v41, 7
    %v43 = vsub.s32 0, %v42
    %v44 = vrot.slane %v21, %v43
    %v45 = vlaneseq
    %v46 = vshrl.u32 %v45, 7
    %v47 = vsub.s32 4, %v46
    %v48 = vrot.slane %v21, %v47
    %v49 = vlaneseq
    %v50 = vshrl.u32 %v49, 7
    %v51 = vsub.s32 0, %v50
    %v52 = vrot.slane %v22, %v51
    %v53 = vlaneseq
    %v54 = vshrl.u32 %v53, 7
    %v55 = vsub.s32 4, %v54
    %v56 = vrot.slane %v22, %v55
    %v57 = vlaneseq
    %v58 = vshrl.u32 %v57, 7
    %v59 = vsub.s32 0, %v58
    %v60 = vrot.slane %v23, %v59
    %v61 = vlaneseq
    %v62 = vshrl.u32 %v61, 7
    %v63 = vsub.s32 4, %v62
    %v64 = vrot.slane %v23, %v63
    %v65 = vlaneseq
    %v66 = vshrl.u32 %v65, 7
    %v67 = vsub.s32 0, %v66
    %v68 = vrot.slane %v24, %v67
    %v69 = vlaneseq
    %v70 = vshrl.u32 %v69, 7
    %v71 = vsub.s32 4, %v70
    %v72 = vrot.slane %v24, %v71
    %v73 = vlaneseq
    %v74 = vshrl.u32 %v73, 7
    %v75 = vsub.s32 0, %v74
    %v76 = vrot.slane %v25, %v75
    %v77 = vlaneseq
    %v78 = vshrl.u32 %v77, 7
    %v79 = vsub.s32 4, %v78
    %v80 = vrot.slane %v25, %v79
    %v81 = vlaneseq
    %v82 = vshrl.u32 %v81, 7
    %v83 = vsub.s32 0, %v82
    %v84 = vrot.slane %v26, %v83
    %v85 = vlaneseq
    %v86 = vshrl.u32 %v85, 7
    %v87 = vsub.s32 4, %v86
    %v88 = vrot.slane %v26, %v87
    %v89 = vlaneseq
    %v90 = vshrl.u32 %v89, 7
    %v91 = vsub.s32 0, %v90
    %v92 = vrot.slane %v27, %v91
    %v93 = vlaneseq
    %v94 = vshrl.u32 %v93, 7
    %v95 = vsub.s32 4, %v94
    %v96 = vrot.slane %v27, %v95
    %v97 = vlaneseq
    %v98 = vshrl.u32 %v97, 7
    %v99 = vsub.s32 0, %v98
    %v100 = vrot.slane %v28, %v99
    %v101 = vlaneseq
    %v102 = vshrl.u32 %v101, 7
    %v103 = vsub.s32 4, %v102
    %v104 = vrot.slane %v28, %v103
    %v121 = vlaneseq
    %v122 = vshrl.u32 %v121, 7
    %v123 = vsub.s32 0, %v122
    %v124 = vrot.slane %v44, %v123
    %v125 = vlaneseq
    %v126 = vshrl.u32 %v125, 7
    %v127 = vsub.s32 0, %v126
    %v128 = vrot.slane %v48, %v127
    %v129 = vlaneseq
    %v130 = vshrl.u32 %v129, 7
    %v131 = vsub.s32 0, %v130
    %v132 = vrot.slane %v52, %v131
    %v133 = vlaneseq
    %v134 = vshrl.u32 %v133, 7
    %v135 = vsub.s32 0, %v134
    %v136 = vrot.slane %v56, %v135
    %v137 = vlaneseq
    %v138 = vshrl.u32 %v137, 7
    %v139 = vsub.s32 0, %v138
    %v140 = vrot.slane %v60, %v139
    %v141 = vlaneseq
    %v142 = vshrl.u32 %v141, 7
    %v143 = vsub.s32 0, %v142
    %v144 = vrot.slane %v64, %v143
    %v145 = vlaneseq
    %v146 = vshrl.u32 %v145, 7
    %v147 = vsub.s32 0, %v146
    %v148 = vrot.slane %v68, %v147
    %v149 = vlaneseq
    %v150 = vshrl.u32 %v149, 7
    %v151 = vsub.s32 0, %v150
    %v152 = vrot.slane %v72, %v151
    %v153 = vlaneseq
    %v154 = vshrl.u32 %v153, 7
    %v155 = vsub.s32 0, %v154
    %v156 = vrot.slane %v76, %v155
    %v157 = vlaneseq
    %v158 = vshrl.u32 %v157, 7
    %v159 = vsub.s32 0, %v158
    %v160 = vrot.slane %v80, %v159
    %v161 = vlaneseq
    %v162 = vshrl.u32 %v161, 7
    %v163 = vsub.s32 0, %v162
    %v164 = vrot.slane %v84, %v163
    %v165 = vlaneseq
    %v166 = vshrl.u32 %v165, 7
    %v167 = vsub.s32 0, %v166
    %v168 = vrot.slane %v88, %v167
    %v169 = vlaneseq
    %v170 = vshrl.u32 %v169, 7
    %v171 = vsub.s32 0, %v170
    %v172 = vrot.slane %v92, %v171
    %v173 = vlaneseq
    %v174 = vshrl.u32 %v173, 7
    %v175 = vsub.s32 0, %v174
    %v176 = vrot.slane %v96, %v175
    %v177 = vlaneseq
    %v178 = vshrl.u32 %v177, 7
    %v179 = vsub.s32 0, %v178
    %v180 = vrot.slane %v100, %v179
    %v181 = vlaneseq
    %v182 = vshrl.u32 %v181, 7
    %v183 = vsub.s32 0, %v182
    %v184 = vrot.slane %v104, %v183
    %186 = vset.pattern.permute.xlu0 0
    %187 = vperm.xlu0 %186, %v29
    %v188 = vpop.permute.xlu0 %187
    %191 = vset.pattern.permute.xlu0 0
    %192 = vperm.xlu0 %191, %v30
    %v193 = vpop.permute.xlu0 %192
    %196 = vset.pattern.permute.xlu0 0
    %197 = vperm.xlu0 %196, %v31
    %v198 = vpop.permute.xlu0 %197
    %201 = vset.pattern.permute.xlu0 0
    %202 = vperm.xlu0 %201, %v32
    %v203 = vpop.permute.xlu0 %202
    %v205 = vmul.f32 %v124, %v188
    %v206 = vmul.f32 %v128, %v188
    %v207 = vmul.f32 %v124, %v193
    %v208 = vmul.f32 %v128, %v193
    %v209 = vmul.f32 %v124, %v198
    %v210 = vmul.f32 %v128, %v198
    %v211 = vmul.f32 %v124, %v203
    %v212 = vmul.f32 %v128, %v203
    %v213 = vmul.f32 %v132, %v188
    %v214 = vmul.f32 %v136, %v188
    %v215 = vmul.f32 %v132, %v193
    %v216 = vmul.f32 %v136, %v193
    %v217 = vmul.f32 %v132, %v198
    %v218 = vmul.f32 %v136, %v198
    %v219 = vmul.f32 %v132, %v203
    %v220 = vmul.f32 %v136, %v203
    %v221 = vmul.f32 %v140, %v188
    %v222 = vmul.f32 %v144, %v188
    %v223 = vmul.f32 %v140, %v193
    %v224 = vmul.f32 %v144, %v193
    %v225 = vmul.f32 %v140, %v198
    %v226 = vmul.f32 %v144, %v198
    %v227 = vmul.f32 %v140, %v203
    %v228 = vmul.f32 %v144, %v203
    %v229 = vmul.f32 %v148, %v188
    %v230 = vmul.f32 %v152, %v188
    %v231 = vmul.f32 %v148, %v193
    %v232 = vmul.f32 %v152, %v193
    %v233 = vmul.f32 %v148, %v198
    %v234 = vmul.f32 %v152, %v198
    %v235 = vmul.f32 %v148, %v203
    %v236 = vmul.f32 %v152, %v203
    %v237 = vmul.f32 %v156, %v188
    %v238 = vmul.f32 %v160, %v188
    %v239 = vmul.f32 %v156, %v193
    %v240 = vmul.f32 %v160, %v193
    %v241 = vmul.f32 %v156, %v198
    %v242 = vmul.f32 %v160, %v198
    %v243 = vmul.f32 %v156, %v203
    %v244 = vmul.f32 %v160, %v203
    %v245 = vmul.f32 %v164, %v188
    %v246 = vmul.f32 %v168, %v188
    %v247 = vmul.f32 %v164, %v193
    %v248 = vmul.f32 %v168, %v193
    %v249 = vmul.f32 %v164, %v198
    %v250 = vmul.f32 %v168, %v198
    %v251 = vmul.f32 %v164, %v203
    %v252 = vmul.f32 %v168, %v203
    %v253 = vmul.f32 %v172, %v188
    %v254 = vmul.f32 %v176, %v188
    %v255 = vmul.f32 %v172, %v193
    %v256 = vmul.f32 %v176, %v193
    %v257 = vmul.f32 %v172, %v198
    %v258 = vmul.f32 %v176, %v198
    %v259 = vmul.f32 %v172, %v203
    %v260 = vmul.f32 %v176, %v203
    %v261 = vmul.f32 %v180, %v188
    %v262 = vmul.f32 %v184, %v188
    %v263 = vmul.f32 %v180, %v193
    %v264 = vmul.f32 %v184, %v193
    %v265 = vmul.f32 %v180, %v198
    %v266 = vmul.f32 %v184, %v198
    %v267 = vmul.f32 %v180, %v203
    %v268 = vmul.f32 %v184, %v203
    %s269 = scalar_lea.vmem %s1, 32
    %v270 = vld [vmem:[%s269] sm:$0xff]
    %v271 = vld [vmem:[%s269 + $0x8] sm:$0xff]
    %v272 = vld [vmem:[%s269 + $0x10] sm:$0xff]
    %v273 = vld [vmem:[%s269 + $0x18] sm:$0xff]
    %v274 = vlaneseq
    %v275 = vshrl.u32 %v274, 7
    %v276 = vsub.s32 1, %v275
    %v277 = vrot.slane %v21, %v276
    %v278 = vlaneseq
    %v279 = vshrl.u32 %v278, 7
    %v280 = vsub.s32 5, %v279
    %v281 = vrot.slane %v21, %v280
    %v282 = vlaneseq
    %v283 = vshrl.u32 %v282, 7
    %v284 = vsub.s32 1, %v283
    %v285 = vrot.slane %v22, %v284
    %v286 = vlaneseq
    %v287 = vshrl.u32 %v286, 7
    %v288 = vsub.s32 5, %v287
    %v289 = vrot.slane %v22, %v288
    %v290 = vlaneseq
    %v291 = vshrl.u32 %v290, 7
    %v292 = vsub.s32 1, %v291
    %v293 = vrot.slane %v23, %v292
    %v294 = vlaneseq
    %v295 = vshrl.u32 %v294, 7
    %v296 = vsub.s32 5, %v295
    %v297 = vrot.slane %v23, %v296
    %v298 = vlaneseq
    %v299 = vshrl.u32 %v298, 7
    %v300 = vsub.s32 1, %v299
    %v301 = vrot.slane %v24, %v300
    %v302 = vlaneseq
    %v303 = vshrl.u32 %v302, 7
    %v304 = vsub.s32 5, %v303
    %v305 = vrot.slane %v24, %v304
    %v306 = vlaneseq
    %v307 = vshrl.u32 %v306, 7
    %v308 = vsub.s32 1, %v307
    %v309 = vrot.slane %v25, %v308
    %v310 = vlaneseq
    %v311 = vshrl.u32 %v310, 7
    %v312 = vsub.s32 5, %v311
    %v313 = vrot.slane %v25, %v312
    %v314 = vlaneseq
    %v315 = vshrl.u32 %v314, 7
    %v316 = vsub.s32 1, %v315
    %v317 = vrot.slane %v26, %v316
    %v318 = vlaneseq
    %v319 = vshrl.u32 %v318, 7
    %v320 = vsub.s32 5, %v319
    %v321 = vrot.slane %v26, %v320
    %v322 = vlaneseq
    %v323 = vshrl.u32 %v322, 7
    %v324 = vsub.s32 1, %v323
    %v325 = vrot.slane %v27, %v324
    %v326 = vlaneseq
    %v327 = vshrl.u32 %v326, 7
    %v328 = vsub.s32 5, %v327
    %v329 = vrot.slane %v27, %v328
    %v330 = vlaneseq
    %v331 = vshrl.u32 %v330, 7
    %v332 = vsub.s32 1, %v331
    %v333 = vrot.slane %v28, %v332
    %v334 = vlaneseq
    %v335 = vshrl.u32 %v334, 7
    %v336 = vsub.s32 5, %v335
    %v337 = vrot.slane %v28, %v336
    %v354 = vlaneseq
    %v355 = vshrl.u32 %v354, 7
    %v356 = vsub.s32 1, %v355
    %v357 = vrot.slane %v277, %v356
    %v358 = vlaneseq
    %v359 = vshrl.u32 %v358, 7
    %v360 = vsub.s32 1, %v359
    %v361 = vrot.slane %v281, %v360
    %v362 = vlaneseq
    %v363 = vshrl.u32 %v362, 7
    %v364 = vsub.s32 1, %v363
    %v365 = vrot.slane %v285, %v364
    %v366 = vlaneseq
    %v367 = vshrl.u32 %v366, 7
    %v368 = vsub.s32 1, %v367
    %v369 = vrot.slane %v289, %v368
    %v370 = vlaneseq
    %v371 = vshrl.u32 %v370, 7
    %v372 = vsub.s32 1, %v371
    %v373 = vrot.slane %v293, %v372
    %v374 = vlaneseq
    %v375 = vshrl.u32 %v374, 7
    %v376 = vsub.s32 1, %v375
    %v377 = vrot.slane %v297, %v376
    %v378 = vlaneseq
    %v379 = vshrl.u32 %v378, 7
    %v380 = vsub.s32 1, %v379
    %v381 = vrot.slane %v301, %v380
    %v382 = vlaneseq
    %v383 = vshrl.u32 %v382, 7
    %v384 = vsub.s32 1, %v383
    %v385 = vrot.slane %v305, %v384
    %v386 = vlaneseq
    %v387 = vshrl.u32 %v386, 7
    %v388 = vsub.s32 1, %v387
    %v389 = vrot.slane %v309, %v388
    %v390 = vlaneseq
    %v391 = vshrl.u32 %v390, 7
    %v392 = vsub.s32 1, %v391
    %v393 = vrot.slane %v313, %v392
    %v394 = vlaneseq
    %v395 = vshrl.u32 %v394, 7
    %v396 = vsub.s32 1, %v395
    %v397 = vrot.slane %v317, %v396
    %v398 = vlaneseq
    %v399 = vshrl.u32 %v398, 7
    %v400 = vsub.s32 1, %v399
    %v401 = vrot.slane %v321, %v400
    %v402 = vlaneseq
    %v403 = vshrl.u32 %v402, 7
    %v404 = vsub.s32 1, %v403
    %v405 = vrot.slane %v325, %v404
    %v406 = vlaneseq
    %v407 = vshrl.u32 %v406, 7
    %v408 = vsub.s32 1, %v407
    %v409 = vrot.slane %v329, %v408
    %v410 = vlaneseq
    %v411 = vshrl.u32 %v410, 7
    %v412 = vsub.s32 1, %v411
    %v413 = vrot.slane %v333, %v412
    %v414 = vlaneseq
    %v415 = vshrl.u32 %v414, 7
    %v416 = vsub.s32 1, %v415
    %v417 = vrot.slane %v337, %v416
    %419 = vset.pattern.permute.xlu0 0
    %420 = vperm.xlu0 %419, %v270
    %v421 = vpop.permute.xlu0 %420
    %424 = vset.pattern.permute.xlu0 0
    %425 = vperm.xlu0 %424, %v271
    %v426 = vpop.permute.xlu0 %425
    %429 = vset.pattern.permute.xlu0 0
    %430 = vperm.xlu0 %429, %v272
    %v431 = vpop.permute.xlu0 %430
    %434 = vset.pattern.permute.xlu0 0
    %435 = vperm.xlu0 %434, %v273
    %v436 = vpop.permute.xlu0 %435
    %v438 = vmul.f32 %v357, %v421
    %v439 = vmul.f32 %v361, %v421
    %v440 = vmul.f32 %v357, %v426
    %v441 = vmul.f32 %v361, %v426
    %v442 = vmul.f32 %v357, %v431
    %v443 = vmul.f32 %v361, %v431
    %v444 = vmul.f32 %v357, %v436
    %v445 = vmul.f32 %v361, %v436
    %v446 = vmul.f32 %v365, %v421
    %v447 = vmul.f32 %v369, %v421
    %v448 = vmul.f32 %v365, %v426
    %v449 = vmul.f32 %v369, %v426
    %v450 = vmul.f32 %v365, %v431
    %v451 = vmul.f32 %v369, %v431
    %v452 = vmul.f32 %v365, %v436
    %v453 = vmul.f32 %v369, %v436
    %v454 = vmul.f32 %v373, %v421
    %v455 = vmul.f32 %v377, %v421
    %v456 = vmul.f32 %v373, %v426
    %v457 = vmul.f32 %v377, %v426
    %v458 = vmul.f32 %v373, %v431
    %v459 = vmul.f32 %v377, %v431
    %v460 = vmul.f32 %v373, %v436
    %v461 = vmul.f32 %v377, %v436
    %v462 = vmul.f32 %v381, %v421
    %v463 = vmul.f32 %v385, %v421
    %v464 = vmul.f32 %v381, %v426
    %v465 = vmul.f32 %v385, %v426
    %v466 = vmul.f32 %v381, %v431
    %v467 = vmul.f32 %v385, %v431
    %v468 = vmul.f32 %v381, %v436
    %v469 = vmul.f32 %v385, %v436
    %v470 = vmul.f32 %v389, %v421
    %v471 = vmul.f32 %v393, %v421
    %v472 = vmul.f32 %v389, %v426
    %v473 = vmul.f32 %v393, %v426
    %v474 = vmul.f32 %v389, %v431
    %v475 = vmul.f32 %v393, %v431
    %v476 = vmul.f32 %v389, %v436
    %v477 = vmul.f32 %v393, %v436
    %v478 = vmul.f32 %v397, %v421
    %v479 = vmul.f32 %v401, %v421
    %v480 = vmul.f32 %v397, %v426
    %v481 = vmul.f32 %v401, %v426
    %v482 = vmul.f32 %v397, %v431
    %v483 = vmul.f32 %v401, %v431
    %v484 = vmul.f32 %v397, %v436
    %v485 = vmul.f32 %v401, %v436
    %v486 = vmul.f32 %v405, %v421
    %v487 = vmul.f32 %v409, %v421
    %v488 = vmul.f32 %v405, %v426
    %v489 = vmul.f32 %v409, %v426
    %v490 = vmul.f32 %v405, %v431
    %v491 = vmul.f32 %v409, %v431
    %v492 = vmul.f32 %v405, %v436
    %v493 = vmul.f32 %v409, %v436
    %v494 = vmul.f32 %v413, %v421
    %v495 = vmul.f32 %v417, %v421
    %v496 = vmul.f32 %v413, %v426
    %v497 = vmul.f32 %v417, %v426
    %v498 = vmul.f32 %v413, %v431
    %v499 = vmul.f32 %v417, %v431
    %v500 = vmul.f32 %v413, %v436
    %v501 = vmul.f32 %v417, %v436
    %v502 = vadd.f32 %v205, %v438
    %v503 = vadd.f32 %v206, %v439
    %v504 = vadd.f32 %v207, %v440
    %v505 = vadd.f32 %v208, %v441
    %v506 = vadd.f32 %v209, %v442
    %v507 = vadd.f32 %v210, %v443
    %v508 = vadd.f32 %v211, %v444
    %v509 = vadd.f32 %v212, %v445
    %v510 = vadd.f32 %v213, %v446
    %v511 = vadd.f32 %v214, %v447
    %v512 = vadd.f32 %v215, %v448
    %v513 = vadd.f32 %v216, %v449
    %v514 = vadd.f32 %v217, %v450
    %v515 = vadd.f32 %v218, %v451
    %v516 = vadd.f32 %v219, %v452
    %v517 = vadd.f32 %v220, %v453
    %v518 = vadd.f32 %v221, %v454
    %v519 = vadd.f32 %v222, %v455
    %v520 = vadd.f32 %v223, %v456
    %v521 = vadd.f32 %v224, %v457
    %v522 = vadd.f32 %v225, %v458
    %v523 = vadd.f32 %v226, %v459
    %v524 = vadd.f32 %v227, %v460
    %v525 = vadd.f32 %v228, %v461
    %v526 = vadd.f32 %v229, %v462
    %v527 = vadd.f32 %v230, %v463
    %v528 = vadd.f32 %v231, %v464
    %v529 = vadd.f32 %v232, %v465
    %v530 = vadd.f32 %v233, %v466
    %v531 = vadd.f32 %v234, %v467
    %v532 = vadd.f32 %v235, %v468
    %v533 = vadd.f32 %v236, %v469
    %v534 = vadd.f32 %v237, %v470
    %v535 = vadd.f32 %v238, %v471
    %v536 = vadd.f32 %v239, %v472
    %v537 = vadd.f32 %v240, %v473
    %v538 = vadd.f32 %v241, %v474
    %v539 = vadd.f32 %v242, %v475
    %v540 = vadd.f32 %v243, %v476
    %v541 = vadd.f32 %v244, %v477
    %v542 = vadd.f32 %v245, %v478
    %v543 = vadd.f32 %v246, %v479
    %v544 = vadd.f32 %v247, %v480
    %v545 = vadd.f32 %v248, %v481
    %v546 = vadd.f32 %v249, %v482
    %v547 = vadd.f32 %v250, %v483
    %v548 = vadd.f32 %v251, %v484
    %v549 = vadd.f32 %v252, %v485
    %v550 = vadd.f32 %v253, %v486
    %v551 = vadd.f32 %v254, %v487
    %v552 = vadd.f32 %v255, %v488
    %v553 = vadd.f32 %v256, %v489
    %v554 = vadd.f32 %v257, %v490
    %v555 = vadd.f32 %v258, %v491
    %v556 = vadd.f32 %v259, %v492
    %v557 = vadd.f32 %v260, %v493
    %v558 = vadd.f32 %v261, %v494
    %v559 = vadd.f32 %v262, %v495
    %v560 = vadd.f32 %v263, %v496
    %v561 = vadd.f32 %v264, %v497
    %v562 = vadd.f32 %v265, %v498
    %v563 = vadd.f32 %v266, %v499
    %v564 = vadd.f32 %v267, %v500
    %v565 = vadd.f32 %v268, %v501
    %s566 = scalar_lea.vmem %s1, 64
    %v567 = vld [vmem:[%s566] sm:$0xff]
    %v568 = vld [vmem:[%s566 + $0x8] sm:$0xff]
    %v569 = vld [vmem:[%s566 + $0x10] sm:$0xff]
    %v570 = vld [vmem:[%s566 + $0x18] sm:$0xff]
    %v571 = vlaneseq
    %v572 = vshrl.u32 %v571, 7
    %v573 = vsub.s32 2, %v572
    %v574 = vrot.slane %v21, %v573
    %v575 = vlaneseq
    %v576 = vshrl.u32 %v575, 7
    %v577 = vsub.s32 6, %v576
    %v578 = vrot.slane %v21, %v577
    %v579 = vlaneseq
    %v580 = vshrl.u32 %v579, 7
    %v581 = vsub.s32 2, %v580
    %v582 = vrot.slane %v22, %v581
    %v583 = vlaneseq
    %v584 = vshrl.u32 %v583, 7
    %v585 = vsub.s32 6, %v584
    %v586 = vrot.slane %v22, %v585
    %v587 = vlaneseq
    %v588 = vshrl.u32 %v587, 7
    %v589 = vsub.s32 2, %v588
    %v590 = vrot.slane %v23, %v589
    %v591 = vlaneseq
    %v592 = vshrl.u32 %v591, 7
    %v593 = vsub.s32 6, %v592
    %v594 = vrot.slane %v23, %v593
    %v595 = vlaneseq
    %v596 = vshrl.u32 %v595, 7
    %v597 = vsub.s32 2, %v596
    %v598 = vrot.slane %v24, %v597
    %v599 = vlaneseq
    %v600 = vshrl.u32 %v599, 7
    %v601 = vsub.s32 6, %v600
    %v602 = vrot.slane %v24, %v601
    %v603 = vlaneseq
    %v604 = vshrl.u32 %v603, 7
    %v605 = vsub.s32 2, %v604
    %v606 = vrot.slane %v25, %v605
    %v607 = vlaneseq
    %v608 = vshrl.u32 %v607, 7
    %v609 = vsub.s32 6, %v608
    %v610 = vrot.slane %v25, %v609
    %v611 = vlaneseq
    %v612 = vshrl.u32 %v611, 7
    %v613 = vsub.s32 2, %v612
    %v614 = vrot.slane %v26, %v613
    %v615 = vlaneseq
    %v616 = vshrl.u32 %v615, 7
    %v617 = vsub.s32 6, %v616
    %v618 = vrot.slane %v26, %v617
    %v619 = vlaneseq
    %v620 = vshrl.u32 %v619, 7
    %v621 = vsub.s32 2, %v620
    %v622 = vrot.slane %v27, %v621
    %v623 = vlaneseq
    %v624 = vshrl.u32 %v623, 7
    %v625 = vsub.s32 6, %v624
    %v626 = vrot.slane %v27, %v625
    %v627 = vlaneseq
    %v628 = vshrl.u32 %v627, 7
    %v629 = vsub.s32 2, %v628
    %v630 = vrot.slane %v28, %v629
    %v631 = vlaneseq
    %v632 = vshrl.u32 %v631, 7
    %v633 = vsub.s32 6, %v632
    %v634 = vrot.slane %v28, %v633
    %v651 = vlaneseq
    %v652 = vshrl.u32 %v651, 7
    %v653 = vsub.s32 2, %v652
    %v654 = vrot.slane %v574, %v653
    %v655 = vlaneseq
    %v656 = vshrl.u32 %v655, 7
    %v657 = vsub.s32 2, %v656
    %v658 = vrot.slane %v578, %v657
    %v659 = vlaneseq
    %v660 = vshrl.u32 %v659, 7
    %v661 = vsub.s32 2, %v660
    %v662 = vrot.slane %v582, %v661
    %v663 = vlaneseq
    %v664 = vshrl.u32 %v663, 7
    %v665 = vsub.s32 2, %v664
    %v666 = vrot.slane %v586, %v665
    %v667 = vlaneseq
    %v668 = vshrl.u32 %v667, 7
    %v669 = vsub.s32 2, %v668
    %v670 = vrot.slane %v590, %v669
    %v671 = vlaneseq
    %v672 = vshrl.u32 %v671, 7
    %v673 = vsub.s32 2, %v672
    %v674 = vrot.slane %v594, %v673
    %v675 = vlaneseq
    %v676 = vshrl.u32 %v675, 7
    %v677 = vsub.s32 2, %v676
    %v678 = vrot.slane %v598, %v677
    %v679 = vlaneseq
    %v680 = vshrl.u32 %v679, 7
    %v681 = vsub.s32 2, %v680
    %v682 = vrot.slane %v602, %v681
    %v683 = vlaneseq
    %v684 = vshrl.u32 %v683, 7
    %v685 = vsub.s32 2, %v684
    %v686 = vrot.slane %v606, %v685
    %v687 = vlaneseq
    %v688 = vshrl.u32 %v687, 7
    %v689 = vsub.s32 2, %v688
    %v690 = vrot.slane %v610, %v689
    %v691 = vlaneseq
    %v692 = vshrl.u32 %v691, 7
    %v693 = vsub.s32 2, %v692
    %v694 = vrot.slane %v614, %v693
    %v695 = vlaneseq
    %v696 = vshrl.u32 %v695, 7
    %v697 = vsub.s32 2, %v696
    %v698 = vrot.slane %v618, %v697
    %v699 = vlaneseq
    %v700 = vshrl.u32 %v699, 7
    %v701 = vsub.s32 2, %v700
    %v702 = vrot.slane %v622, %v701
    %v703 = vlaneseq
    %v704 = vshrl.u32 %v703, 7
    %v705 = vsub.s32 2, %v704
    %v706 = vrot.slane %v626, %v705
    %v707 = vlaneseq
    %v708 = vshrl.u32 %v707, 7
    %v709 = vsub.s32 2, %v708
    %v710 = vrot.slane %v630, %v709
    %v711 = vlaneseq
    %v712 = vshrl.u32 %v711, 7
    %v713 = vsub.s32 2, %v712
    %v714 = vrot.slane %v634, %v713
    %716 = vset.pattern.permute.xlu0 0
    %717 = vperm.xlu0 %716, %v567
    %v718 = vpop.permute.xlu0 %717
    %721 = vset.pattern.permute.xlu0 0
    %722 = vperm.xlu0 %721, %v568
    %v723 = vpop.permute.xlu0 %722
    %726 = vset.pattern.permute.xlu0 0
    %727 = vperm.xlu0 %726, %v569
    %v728 = vpop.permute.xlu0 %727
    %731 = vset.pattern.permute.xlu0 0
    %732 = vperm.xlu0 %731, %v570
    %v733 = vpop.permute.xlu0 %732
    %v735 = vmul.f32 %v654, %v718
    %v736 = vmul.f32 %v658, %v718
    %v737 = vmul.f32 %v654, %v723
    %v738 = vmul.f32 %v658, %v723
    %v739 = vmul.f32 %v654, %v728
    %v740 = vmul.f32 %v658, %v728
    %v741 = vmul.f32 %v654, %v733
    %v742 = vmul.f32 %v658, %v733
    %v743 = vmul.f32 %v662, %v718
    %v744 = vmul.f32 %v666, %v718
    %v745 = vmul.f32 %v662, %v723
    %v746 = vmul.f32 %v666, %v723
    %v747 = vmul.f32 %v662, %v728
    %v748 = vmul.f32 %v666, %v728
    %v749 = vmul.f32 %v662, %v733
    %v750 = vmul.f32 %v666, %v733
    %v751 = vmul.f32 %v670, %v718
    %v752 = vmul.f32 %v674, %v718
    %v753 = vmul.f32 %v670, %v723
    %v754 = vmul.f32 %v674, %v723
    %v755 = vmul.f32 %v670, %v728
    %v756 = vmul.f32 %v674, %v728
    %v757 = vmul.f32 %v670, %v733
    %v758 = vmul.f32 %v674, %v733
    %v759 = vmul.f32 %v678, %v718
    %v760 = vmul.f32 %v682, %v718
    %v761 = vmul.f32 %v678, %v723
    %v762 = vmul.f32 %v682, %v723
    %v763 = vmul.f32 %v678, %v728
    %v764 = vmul.f32 %v682, %v728
    %v765 = vmul.f32 %v678, %v733
    %v766 = vmul.f32 %v682, %v733
    %v767 = vmul.f32 %v686, %v718
    %v768 = vmul.f32 %v690, %v718
    %v769 = vmul.f32 %v686, %v723
    %v770 = vmul.f32 %v690, %v723
    %v771 = vmul.f32 %v686, %v728
    %v772 = vmul.f32 %v690, %v728
    %v773 = vmul.f32 %v686, %v733
    %v774 = vmul.f32 %v690, %v733
    %v775 = vmul.f32 %v694, %v718
    %v776 = vmul.f32 %v698, %v718
    %v777 = vmul.f32 %v694, %v723
    %v778 = vmul.f32 %v698, %v723
    %v779 = vmul.f32 %v694, %v728
    %v780 = vmul.f32 %v698, %v728
    %v781 = vmul.f32 %v694, %v733
    %v782 = vmul.f32 %v698, %v733
    %v783 = vmul.f32 %v702, %v718
    %v784 = vmul.f32 %v706, %v718
    %v785 = vmul.f32 %v702, %v723
    %v786 = vmul.f32 %v706, %v723
    %v787 = vmul.f32 %v702, %v728
    %v788 = vmul.f32 %v706, %v728
    %v789 = vmul.f32 %v702, %v733
    %v790 = vmul.f32 %v706, %v733
    %v791 = vmul.f32 %v710, %v718
    %v792 = vmul.f32 %v714, %v718
    %v793 = vmul.f32 %v710, %v723
    %v794 = vmul.f32 %v714, %v723
    %v795 = vmul.f32 %v710, %v728
    %v796 = vmul.f32 %v714, %v728
    %v797 = vmul.f32 %v710, %v733
    %v798 = vmul.f32 %v714, %v733
    %v799 = vadd.f32 %v502, %v735
    %v800 = vadd.f32 %v503, %v736
    %v801 = vadd.f32 %v504, %v737
    %v802 = vadd.f32 %v505, %v738
    %v803 = vadd.f32 %v506, %v739
    %v804 = vadd.f32 %v507, %v740
    %v805 = vadd.f32 %v508, %v741
    %v806 = vadd.f32 %v509, %v742
    %v807 = vadd.f32 %v510, %v743
    %v808 = vadd.f32 %v511, %v744
    %v809 = vadd.f32 %v512, %v745
    %v810 = vadd.f32 %v513, %v746
    %v811 = vadd.f32 %v514, %v747
    %v812 = vadd.f32 %v515, %v748
    %v813 = vadd.f32 %v516, %v749
    %v814 = vadd.f32 %v517, %v750
    %v815 = vadd.f32 %v518, %v751
    %v816 = vadd.f32 %v519, %v752
    %v817 = vadd.f32 %v520, %v753
    %v818 = vadd.f32 %v521, %v754
    %v819 = vadd.f32 %v522, %v755
    %v820 = vadd.f32 %v523, %v756
    %v821 = vadd.f32 %v524, %v757
    %v822 = vadd.f32 %v525, %v758
    %v823 = vadd.f32 %v526, %v759
    %v824 = vadd.f32 %v527, %v760
    %v825 = vadd.f32 %v528, %v761
    %v826 = vadd.f32 %v529, %v762
    %v827 = vadd.f32 %v530, %v763
    %v828 = vadd.f32 %v531, %v764
    %v829 = vadd.f32 %v532, %v765
    %v830 = vadd.f32 %v533, %v766
    %v831 = vadd.f32 %v534, %v767
    %v832 = vadd.f32 %v535, %v768
    %v833 = vadd.f32 %v536, %v769
    %v834 = vadd.f32 %v537, %v770
    %v835 = vadd.f32 %v538, %v771
    %v836 = vadd.f32 %v539, %v772
    %v837 = vadd.f32 %v540, %v773
    %v838 = vadd.f32 %v541, %v774
    %v839 = vadd.f32 %v542, %v775
    %v840 = vadd.f32 %v543, %v776
    %v841 = vadd.f32 %v544, %v777
    %v842 = vadd.f32 %v545, %v778
    %v843 = vadd.f32 %v546, %v779
    %v844 = vadd.f32 %v547, %v780
    %v845 = vadd.f32 %v548, %v781
    %v846 = vadd.f32 %v549, %v782
    %v847 = vadd.f32 %v550, %v783
    %v848 = vadd.f32 %v551, %v784
    %v849 = vadd.f32 %v552, %v785
    %v850 = vadd.f32 %v553, %v786
    %v851 = vadd.f32 %v554, %v787
    %v852 = vadd.f32 %v555, %v788
    %v853 = vadd.f32 %v556, %v789
    %v854 = vadd.f32 %v557, %v790
    %v855 = vadd.f32 %v558, %v791
    %v856 = vadd.f32 %v559, %v792
    %v857 = vadd.f32 %v560, %v793
    %v858 = vadd.f32 %v561, %v794
    %v859 = vadd.f32 %v562, %v795
    %v860 = vadd.f32 %v563, %v796
    %v861 = vadd.f32 %v564, %v797
    %v862 = vadd.f32 %v565, %v798
    %s863 = scalar_lea.vmem %s1, 96
    %v864 = vld [vmem:[%s863] sm:$0xff]
    %v865 = vld [vmem:[%s863 + $0x8] sm:$0xff]
    %v866 = vld [vmem:[%s863 + $0x10] sm:$0xff]
    %v867 = vld [vmem:[%s863 + $0x18] sm:$0xff]
    %v868 = vlaneseq
    %v869 = vshrl.u32 %v868, 7
    %v870 = vsub.s32 3, %v869
    %v871 = vrot.slane %v21, %v870
    %v872 = vlaneseq
    %v873 = vshrl.u32 %v872, 7
    %v874 = vsub.s32 7, %v873
    %v875 = vrot.slane %v21, %v874
    %v876 = vlaneseq
    %v877 = vshrl.u32 %v876, 7
    %v878 = vsub.s32 3, %v877
    %v879 = vrot.slane %v22, %v878
    %v880 = vlaneseq
    %v881 = vshrl.u32 %v880, 7
    %v882 = vsub.s32 7, %v881
    %v883 = vrot.slane %v22, %v882
    %v884 = vlaneseq
    %v885 = vshrl.u32 %v884, 7
    %v886 = vsub.s32 3, %v885
    %v887 = vrot.slane %v23, %v886
    %v888 = vlaneseq
    %v889 = vshrl.u32 %v888, 7
    %v890 = vsub.s32 7, %v889
    %v891 = vrot.slane %v23, %v890
    %v892 = vlaneseq
    %v893 = vshrl.u32 %v892, 7
    %v894 = vsub.s32 3, %v893
    %v895 = vrot.slane %v24, %v894
    %v896 = vlaneseq
    %v897 = vshrl.u32 %v896, 7
    %v898 = vsub.s32 7, %v897
    %v899 = vrot.slane %v24, %v898
    %v900 = vlaneseq
    %v901 = vshrl.u32 %v900, 7
    %v902 = vsub.s32 3, %v901
    %v903 = vrot.slane %v25, %v902
    %v904 = vlaneseq
    %v905 = vshrl.u32 %v904, 7
    %v906 = vsub.s32 7, %v905
    %v907 = vrot.slane %v25, %v906
    %v908 = vlaneseq
    %v909 = vshrl.u32 %v908, 7
    %v910 = vsub.s32 3, %v909
    %v911 = vrot.slane %v26, %v910
    %v912 = vlaneseq
    %v913 = vshrl.u32 %v912, 7
    %v914 = vsub.s32 7, %v913
    %v915 = vrot.slane %v26, %v914
    %v916 = vlaneseq
    %v917 = vshrl.u32 %v916, 7
    %v918 = vsub.s32 3, %v917
    %v919 = vrot.slane %v27, %v918
    %v920 = vlaneseq
    %v921 = vshrl.u32 %v920, 7
    %v922 = vsub.s32 7, %v921
    %v923 = vrot.slane %v27, %v922
    %v924 = vlaneseq
    %v925 = vshrl.u32 %v924, 7
    %v926 = vsub.s32 3, %v925
    %v927 = vrot.slane %v28, %v926
    %v928 = vlaneseq
    %v929 = vshrl.u32 %v928, 7
    %v930 = vsub.s32 7, %v929
    %v931 = vrot.slane %v28, %v930
    %v948 = vlaneseq
    %v949 = vshrl.u32 %v948, 7
    %v950 = vsub.s32 3, %v949
    %v951 = vrot.slane %v871, %v950
    %v952 = vlaneseq
    %v953 = vshrl.u32 %v952, 7
    %v954 = vsub.s32 3, %v953
    %v955 = vrot.slane %v875, %v954
    %v956 = vlaneseq
    %v957 = vshrl.u32 %v956, 7
    %v958 = vsub.s32 3, %v957
    %v959 = vrot.slane %v879, %v958
    %v960 = vlaneseq
    %v961 = vshrl.u32 %v960, 7
    %v962 = vsub.s32 3, %v961
    %v963 = vrot.slane %v883, %v962
    %v964 = vlaneseq
    %v965 = vshrl.u32 %v964, 7
    %v966 = vsub.s32 3, %v965
    %v967 = vrot.slane %v887, %v966
    %v968 = vlaneseq
    %v969 = vshrl.u32 %v968, 7
    %v970 = vsub.s32 3, %v969
    %v971 = vrot.slane %v891, %v970
    %v972 = vlaneseq
    %v973 = vshrl.u32 %v972, 7
    %v974 = vsub.s32 3, %v973
    %v975 = vrot.slane %v895, %v974
    %v976 = vlaneseq
    %v977 = vshrl.u32 %v976, 7
    %v978 = vsub.s32 3, %v977
    %v979 = vrot.slane %v899, %v978
    %v980 = vlaneseq
    %v981 = vshrl.u32 %v980, 7
    %v982 = vsub.s32 3, %v981
    %v983 = vrot.slane %v903, %v982
    %v984 = vlaneseq
    %v985 = vshrl.u32 %v984, 7
    %v986 = vsub.s32 3, %v985
    %v987 = vrot.slane %v907, %v986
    %v988 = vlaneseq
    %v989 = vshrl.u32 %v988, 7
    %v990 = vsub.s32 3, %v989
    %v991 = vrot.slane %v911, %v990
    %v992 = vlaneseq
    %v993 = vshrl.u32 %v992, 7
    %v994 = vsub.s32 3, %v993
    %v995 = vrot.slane %v915, %v994
    %v996 = vlaneseq
    %v997 = vshrl.u32 %v996, 7
    %v998 = vsub.s32 3, %v997
    %v999 = vrot.slane %v919, %v998
    %v1000 = vlaneseq
    %v1001 = vshrl.u32 %v1000, 7
    %v1002 = vsub.s32 3, %v1001
    %v1003 = vrot.slane %v923, %v1002
    %v1004 = vlaneseq
    %v1005 = vshrl.u32 %v1004, 7
    %v1006 = vsub.s32 3, %v1005
    %v1007 = vrot.slane %v927, %v1006
    %v1008 = vlaneseq
    %v1009 = vshrl.u32 %v1008, 7
    %v1010 = vsub.s32 3, %v1009
    %v1011 = vrot.slane %v931, %v1010
    %1013 = vset.pattern.permute.xlu0 0
    %1014 = vperm.xlu0 %1013, %v864
    %v1015 = vpop.permute.xlu0 %1014
    %1018 = vset.pattern.permute.xlu0 0
    %1019 = vperm.xlu0 %1018, %v865
    %v1020 = vpop.permute.xlu0 %1019
    %1023 = vset.pattern.permute.xlu0 0
    %1024 = vperm.xlu0 %1023, %v866
    %v1025 = vpop.permute.xlu0 %1024
    %1028 = vset.pattern.permute.xlu0 0
    %1029 = vperm.xlu0 %1028, %v867
    %v1030 = vpop.permute.xlu0 %1029
    %v1032 = vmul.f32 %v951, %v1015
    %v1033 = vmul.f32 %v955, %v1015
    %v1034 = vmul.f32 %v951, %v1020
    %v1035 = vmul.f32 %v955, %v1020
    %v1036 = vmul.f32 %v951, %v1025
    %v1037 = vmul.f32 %v955, %v1025
    %v1038 = vmul.f32 %v951, %v1030
    %v1039 = vmul.f32 %v955, %v1030
    %v1040 = vmul.f32 %v959, %v1015
    %v1041 = vmul.f32 %v963, %v1015
    %v1042 = vmul.f32 %v959, %v1020
    %v1043 = vmul.f32 %v963, %v1020
    %v1044 = vmul.f32 %v959, %v1025
    %v1045 = vmul.f32 %v963, %v1025
    %v1046 = vmul.f32 %v959, %v1030
    %v1047 = vmul.f32 %v963, %v1030
    %v1048 = vmul.f32 %v967, %v1015
    %v1049 = vmul.f32 %v971, %v1015
    %v1050 = vmul.f32 %v967, %v1020
    %v1051 = vmul.f32 %v971, %v1020
    %v1052 = vmul.f32 %v967, %v1025
    %v1053 = vmul.f32 %v971, %v1025
    %v1054 = vmul.f32 %v967, %v1030
    %v1055 = vmul.f32 %v971, %v1030
    %v1056 = vmul.f32 %v975, %v1015
    %v1057 = vmul.f32 %v979, %v1015
    %v1058 = vmul.f32 %v975, %v1020
    %v1059 = vmul.f32 %v979, %v1020
    %v1060 = vmul.f32 %v975, %v1025
    %v1061 = vmul.f32 %v979, %v1025
    %v1062 = vmul.f32 %v975, %v1030
    %v1063 = vmul.f32 %v979, %v1030
    %v1064 = vmul.f32 %v983, %v1015
    %v1065 = vmul.f32 %v987, %v1015
    %v1066 = vmul.f32 %v983, %v1020
    %v1067 = vmul.f32 %v987, %v1020
    %v1068 = vmul.f32 %v983, %v1025
    %v1069 = vmul.f32 %v987, %v1025
    %v1070 = vmul.f32 %v983, %v1030
    %v1071 = vmul.f32 %v987, %v1030
    %v1072 = vmul.f32 %v991, %v1015
    %v1073 = vmul.f32 %v995, %v1015
    %v1074 = vmul.f32 %v991, %v1020
    %v1075 = vmul.f32 %v995, %v1020
    %v1076 = vmul.f32 %v991, %v1025
    %v1077 = vmul.f32 %v995, %v1025
    %v1078 = vmul.f32 %v991, %v1030
    %v1079 = vmul.f32 %v995, %v1030
    %v1080 = vmul.f32 %v999, %v1015
    %v1081 = vmul.f32 %v1003, %v1015
    %v1082 = vmul.f32 %v999, %v1020
    %v1083 = vmul.f32 %v1003, %v1020
    %v1084 = vmul.f32 %v999, %v1025
    %v1085 = vmul.f32 %v1003, %v1025
    %v1086 = vmul.f32 %v999, %v1030
    %v1087 = vmul.f32 %v1003, %v1030
    %v1088 = vmul.f32 %v1007, %v1015
    %v1089 = vmul.f32 %v1011, %v1015
    %v1090 = vmul.f32 %v1007, %v1020
    %v1091 = vmul.f32 %v1011, %v1020
    %v1092 = vmul.f32 %v1007, %v1025
    %v1093 = vmul.f32 %v1011, %v1025
    %v1094 = vmul.f32 %v1007, %v1030
    %v1095 = vmul.f32 %v1011, %v1030
    %v1096 = vadd.f32 %v799, %v1032
    %v1097 = vadd.f32 %v800, %v1033
    %v1098 = vadd.f32 %v801, %v1034
    %v1099 = vadd.f32 %v802, %v1035
    %v1100 = vadd.f32 %v803, %v1036
    %v1101 = vadd.f32 %v804, %v1037
    %v1102 = vadd.f32 %v805, %v1038
    %v1103 = vadd.f32 %v806, %v1039
    %v1104 = vadd.f32 %v807, %v1040
    %v1105 = vadd.f32 %v808, %v1041
    %v1106 = vadd.f32 %v809, %v1042
    %v1107 = vadd.f32 %v810, %v1043
    %v1108 = vadd.f32 %v811, %v1044
    %v1109 = vadd.f32 %v812, %v1045
    %v1110 = vadd.f32 %v813, %v1046
    %v1111 = vadd.f32 %v814, %v1047
    %v1112 = vadd.f32 %v815, %v1048
    %v1113 = vadd.f32 %v816, %v1049
    %v1114 = vadd.f32 %v817, %v1050
    %v1115 = vadd.f32 %v818, %v1051
    %v1116 = vadd.f32 %v819, %v1052
    %v1117 = vadd.f32 %v820, %v1053
    %v1118 = vadd.f32 %v821, %v1054
    %v1119 = vadd.f32 %v822, %v1055
    %v1120 = vadd.f32 %v823, %v1056
    %v1121 = vadd.f32 %v824, %v1057
    %v1122 = vadd.f32 %v825, %v1058
    %v1123 = vadd.f32 %v826, %v1059
    %v1124 = vadd.f32 %v827, %v1060
    %v1125 = vadd.f32 %v828, %v1061
    %v1126 = vadd.f32 %v829, %v1062
    %v1127 = vadd.f32 %v830, %v1063
    %v1128 = vadd.f32 %v831, %v1064
    %v1129 = vadd.f32 %v832, %v1065
    %v1130 = vadd.f32 %v833, %v1066
    %v1131 = vadd.f32 %v834, %v1067
    %v1132 = vadd.f32 %v835, %v1068
    %v1133 = vadd.f32 %v836, %v1069
    %v1134 = vadd.f32 %v837, %v1070
    %v1135 = vadd.f32 %v838, %v1071
    %v1136 = vadd.f32 %v839, %v1072
    %v1137 = vadd.f32 %v840, %v1073
    %v1138 = vadd.f32 %v841, %v1074
    %v1139 = vadd.f32 %v842, %v1075
    %v1140 = vadd.f32 %v843, %v1076
    %v1141 = vadd.f32 %v844, %v1077
    %v1142 = vadd.f32 %v845, %v1078
    %v1143 = vadd.f32 %v846, %v1079
    %v1144 = vadd.f32 %v847, %v1080
    %v1145 = vadd.f32 %v848, %v1081
    %v1146 = vadd.f32 %v849, %v1082
    %v1147 = vadd.f32 %v850, %v1083
    %v1148 = vadd.f32 %v851, %v1084
    %v1149 = vadd.f32 %v852, %v1085
    %v1150 = vadd.f32 %v853, %v1086
    %v1151 = vadd.f32 %v854, %v1087
    %v1152 = vadd.f32 %v855, %v1088
    %v1153 = vadd.f32 %v856, %v1089
    %v1154 = vadd.f32 %v857, %v1090
    %v1155 = vadd.f32 %v858, %v1091
    %v1156 = vadd.f32 %v859, %v1092
    %v1157 = vadd.f32 %v860, %v1093
    %v1158 = vadd.f32 %v861, %v1094
    %v1159 = vadd.f32 %v862, %v1095
    %v1160 = vld [vmem:[%s2] sm:$0xff]
    %v1161 = vld [vmem:[%s2 + $0x8] sm:$0xff]
    %v1162 = vld [vmem:[%s2 + $0x10] sm:$0xff]
    %v1163 = vld [vmem:[%s2 + $0x18] sm:$0xff]
    %1165 = vset.pattern.permute.xlu0 0
    %1166 = vperm.xlu0 %1165, %v1160
    %v1167 = vpop.permute.xlu0 %1166
    %1170 = vset.pattern.permute.xlu0 0
    %1171 = vperm.xlu0 %1170, %v1161
    %v1172 = vpop.permute.xlu0 %1171
    %1175 = vset.pattern.permute.xlu0 0
    %1176 = vperm.xlu0 %1175, %v1162
    %v1177 = vpop.permute.xlu0 %1176
    %1180 = vset.pattern.permute.xlu0 0
    %1181 = vperm.xlu0 %1180, %v1163
    %v1182 = vpop.permute.xlu0 %1181
    %v1184 = vadd.f32 %v1096, %v1167
    %v1185 = vadd.f32 %v1097, %v1167
    %v1186 = vadd.f32 %v1098, %v1172
    %v1187 = vadd.f32 %v1099, %v1172
    %v1188 = vadd.f32 %v1100, %v1177
    %v1189 = vadd.f32 %v1101, %v1177
    %v1190 = vadd.f32 %v1102, %v1182
    %v1191 = vadd.f32 %v1103, %v1182
    %v1192 = vadd.f32 %v1104, %v1167
    %v1193 = vadd.f32 %v1105, %v1167
    %v1194 = vadd.f32 %v1106, %v1172
    %v1195 = vadd.f32 %v1107, %v1172
    %v1196 = vadd.f32 %v1108, %v1177
    %v1197 = vadd.f32 %v1109, %v1177
    %v1198 = vadd.f32 %v1110, %v1182
    %v1199 = vadd.f32 %v1111, %v1182
    %v1200 = vadd.f32 %v1112, %v1167
    %v1201 = vadd.f32 %v1113, %v1167
    %v1202 = vadd.f32 %v1114, %v1172
    %v1203 = vadd.f32 %v1115, %v1172
    %v1204 = vadd.f32 %v1116, %v1177
    %v1205 = vadd.f32 %v1117, %v1177
    %v1206 = vadd.f32 %v1118, %v1182
    %v1207 = vadd.f32 %v1119, %v1182
    %v1208 = vadd.f32 %v1120, %v1167
    %v1209 = vadd.f32 %v1121, %v1167
    %v1210 = vadd.f32 %v1122, %v1172
    %v1211 = vadd.f32 %v1123, %v1172
    %v1212 = vadd.f32 %v1124, %v1177
    %v1213 = vadd.f32 %v1125, %v1177
    %v1214 = vadd.f32 %v1126, %v1182
    %v1215 = vadd.f32 %v1127, %v1182
    %v1216 = vadd.f32 %v1128, %v1167
    %v1217 = vadd.f32 %v1129, %v1167
    %v1218 = vadd.f32 %v1130, %v1172
    %v1219 = vadd.f32 %v1131, %v1172
    %v1220 = vadd.f32 %v1132, %v1177
    %v1221 = vadd.f32 %v1133, %v1177
    %v1222 = vadd.f32 %v1134, %v1182
    %v1223 = vadd.f32 %v1135, %v1182
    %v1224 = vadd.f32 %v1136, %v1167
    %v1225 = vadd.f32 %v1137, %v1167
    %v1226 = vadd.f32 %v1138, %v1172
    %v1227 = vadd.f32 %v1139, %v1172
    %v1228 = vadd.f32 %v1140, %v1177
    %v1229 = vadd.f32 %v1141, %v1177
    %v1230 = vadd.f32 %v1142, %v1182
    %v1231 = vadd.f32 %v1143, %v1182
    %v1232 = vadd.f32 %v1144, %v1167
    %v1233 = vadd.f32 %v1145, %v1167
    %v1234 = vadd.f32 %v1146, %v1172
    %v1235 = vadd.f32 %v1147, %v1172
    %v1236 = vadd.f32 %v1148, %v1177
    %v1237 = vadd.f32 %v1149, %v1177
    %v1238 = vadd.f32 %v1150, %v1182
    %v1239 = vadd.f32 %v1151, %v1182
    %v1240 = vadd.f32 %v1152, %v1167
    %v1241 = vadd.f32 %v1153, %v1167
    %v1242 = vadd.f32 %v1154, %v1172
    %v1243 = vadd.f32 %v1155, %v1172
    %v1244 = vadd.f32 %v1156, %v1177
    %v1245 = vadd.f32 %v1157, %v1177
    %v1246 = vadd.f32 %v1158, %v1182
    %v1247 = vadd.f32 %v1159, %v1182
    %v1248 = vmax.f32 %v1184, 0.0
    %v1249 = vmax.f32 %v1185, 0.0
    %v1250 = vmax.f32 %v1186, 0.0
    %v1251 = vmax.f32 %v1187, 0.0
    %v1252 = vmax.f32 %v1188, 0.0
    %v1253 = vmax.f32 %v1189, 0.0
    %v1254 = vmax.f32 %v1190, 0.0
    %v1255 = vmax.f32 %v1191, 0.0
    %v1256 = vmax.f32 %v1192, 0.0
    %v1257 = vmax.f32 %v1193, 0.0
    %v1258 = vmax.f32 %v1194, 0.0
    %v1259 = vmax.f32 %v1195, 0.0
    %v1260 = vmax.f32 %v1196, 0.0
    %v1261 = vmax.f32 %v1197, 0.0
    %v1262 = vmax.f32 %v1198, 0.0
    %v1263 = vmax.f32 %v1199, 0.0
    %v1264 = vmax.f32 %v1200, 0.0
    %v1265 = vmax.f32 %v1201, 0.0
    %v1266 = vmax.f32 %v1202, 0.0
    %v1267 = vmax.f32 %v1203, 0.0
    %v1268 = vmax.f32 %v1204, 0.0
    %v1269 = vmax.f32 %v1205, 0.0
    %v1270 = vmax.f32 %v1206, 0.0
    %v1271 = vmax.f32 %v1207, 0.0
    %v1272 = vmax.f32 %v1208, 0.0
    %v1273 = vmax.f32 %v1209, 0.0
    %v1274 = vmax.f32 %v1210, 0.0
    %v1275 = vmax.f32 %v1211, 0.0
    %v1276 = vmax.f32 %v1212, 0.0
    %v1277 = vmax.f32 %v1213, 0.0
    %v1278 = vmax.f32 %v1214, 0.0
    %v1279 = vmax.f32 %v1215, 0.0
    %v1280 = vmax.f32 %v1216, 0.0
    %v1281 = vmax.f32 %v1217, 0.0
    %v1282 = vmax.f32 %v1218, 0.0
    %v1283 = vmax.f32 %v1219, 0.0
    %v1284 = vmax.f32 %v1220, 0.0
    %v1285 = vmax.f32 %v1221, 0.0
    %v1286 = vmax.f32 %v1222, 0.0
    %v1287 = vmax.f32 %v1223, 0.0
    %v1288 = vmax.f32 %v1224, 0.0
    %v1289 = vmax.f32 %v1225, 0.0
    %v1290 = vmax.f32 %v1226, 0.0
    %v1291 = vmax.f32 %v1227, 0.0
    %v1292 = vmax.f32 %v1228, 0.0
    %v1293 = vmax.f32 %v1229, 0.0
    %v1294 = vmax.f32 %v1230, 0.0
    %v1295 = vmax.f32 %v1231, 0.0
    %v1296 = vmax.f32 %v1232, 0.0
    %v1297 = vmax.f32 %v1233, 0.0
    %v1298 = vmax.f32 %v1234, 0.0
    %v1299 = vmax.f32 %v1235, 0.0
    %v1300 = vmax.f32 %v1236, 0.0
    %v1301 = vmax.f32 %v1237, 0.0
    %v1302 = vmax.f32 %v1238, 0.0
    %v1303 = vmax.f32 %v1239, 0.0
    %v1304 = vmax.f32 %v1240, 0.0
    %v1305 = vmax.f32 %v1241, 0.0
    %v1306 = vmax.f32 %v1242, 0.0
    %v1307 = vmax.f32 %v1243, 0.0
    %v1308 = vmax.f32 %v1244, 0.0
    %v1309 = vmax.f32 %v1245, 0.0
    %v1310 = vmax.f32 %v1246, 0.0
    %v1311 = vmax.f32 %v1247, 0.0
    %v1312 = vadd.f32 %v1248, %v1249
    %1313 = vadd.xlane.f32.xlu0 %v1312
    %v1314 = vpop.xlane.xlu0 %1313
    %v1315 = vadd.f32 %v1250, %v1251
    %1316 = vadd.xlane.f32.xlu0 %v1315
    %v1317 = vpop.xlane.xlu0 %1316
    %v1318 = vadd.f32 %v1252, %v1253
    %1319 = vadd.xlane.f32.xlu0 %v1318
    %v1320 = vpop.xlane.xlu0 %1319
    %v1321 = vadd.f32 %v1254, %v1255
    %1322 = vadd.xlane.f32.xlu0 %v1321
    %v1323 = vpop.xlane.xlu0 %1322
    %v1324 = vadd.f32 %v1256, %v1257
    %1325 = vadd.xlane.f32.xlu0 %v1324
    %v1326 = vpop.xlane.xlu0 %1325
    %v1327 = vadd.f32 %v1258, %v1259
    %1328 = vadd.xlane.f32.xlu0 %v1327
    %v1329 = vpop.xlane.xlu0 %1328
    %v1330 = vadd.f32 %v1260, %v1261
    %1331 = vadd.xlane.f32.xlu0 %v1330
    %v1332 = vpop.xlane.xlu0 %1331
    %v1333 = vadd.f32 %v1262, %v1263
    %1334 = vadd.xlane.f32.xlu0 %v1333
    %v1335 = vpop.xlane.xlu0 %1334
    %v1336 = vadd.f32 %v1264, %v1265
    %1337 = vadd.xlane.f32.xlu0 %v1336
    %v1338 = vpop.xlane.xlu0 %1337
    %v1339 = vadd.f32 %v1266, %v1267
    %1340 = vadd.xlane.f32.xlu0 %v1339
    %v1341 = vpop.xlane.xlu0 %1340
    %v1342 = vadd.f32 %v1268, %v1269
    %1343 = vadd.xlane.f32.xlu0 %v1342
    %v1344 = vpop.xlane.xlu0 %1343
    %v1345 = vadd.f32 %v1270, %v1271
    %1346 = vadd.xlane.f32.xlu0 %v1345
    %v1347 = vpop.xlane.xlu0 %1346
    %v1348 = vadd.f32 %v1272, %v1273
    %1349 = vadd.xlane.f32.xlu0 %v1348
    %v1350 = vpop.xlane.xlu0 %1349
    %v1351 = vadd.f32 %v1274, %v1275
    %1352 = vadd.xlane.f32.xlu0 %v1351
    %v1353 = vpop.xlane.xlu0 %1352
    %v1354 = vadd.f32 %v1276, %v1277
    %1355 = vadd.xlane.f32.xlu0 %v1354
    %v1356 = vpop.xlane.xlu0 %1355
    %v1357 = vadd.f32 %v1278, %v1279
    %1358 = vadd.xlane.f32.xlu0 %v1357
    %v1359 = vpop.xlane.xlu0 %1358
    %v1360 = vadd.f32 %v1280, %v1281
    %1361 = vadd.xlane.f32.xlu0 %v1360
    %v1362 = vpop.xlane.xlu0 %1361
    %v1363 = vadd.f32 %v1282, %v1283
    %1364 = vadd.xlane.f32.xlu0 %v1363
    %v1365 = vpop.xlane.xlu0 %1364
    %v1366 = vadd.f32 %v1284, %v1285
    %1367 = vadd.xlane.f32.xlu0 %v1366
    %v1368 = vpop.xlane.xlu0 %1367
    %v1369 = vadd.f32 %v1286, %v1287
    %1370 = vadd.xlane.f32.xlu0 %v1369
    %v1371 = vpop.xlane.xlu0 %1370
    %v1372 = vadd.f32 %v1288, %v1289
    %1373 = vadd.xlane.f32.xlu0 %v1372
    %v1374 = vpop.xlane.xlu0 %1373
    %v1375 = vadd.f32 %v1290, %v1291
    %1376 = vadd.xlane.f32.xlu0 %v1375
    %v1377 = vpop.xlane.xlu0 %1376
    %v1378 = vadd.f32 %v1292, %v1293
    %1379 = vadd.xlane.f32.xlu0 %v1378
    %v1380 = vpop.xlane.xlu0 %1379
    %v1381 = vadd.f32 %v1294, %v1295
    %1382 = vadd.xlane.f32.xlu0 %v1381
    %v1383 = vpop.xlane.xlu0 %1382
    %v1384 = vadd.f32 %v1296, %v1297
    %1385 = vadd.xlane.f32.xlu0 %v1384
    %v1386 = vpop.xlane.xlu0 %1385
    %v1387 = vadd.f32 %v1298, %v1299
    %1388 = vadd.xlane.f32.xlu0 %v1387
    %v1389 = vpop.xlane.xlu0 %1388
    %v1390 = vadd.f32 %v1300, %v1301
    %1391 = vadd.xlane.f32.xlu0 %v1390
    %v1392 = vpop.xlane.xlu0 %1391
    %v1393 = vadd.f32 %v1302, %v1303
    %1394 = vadd.xlane.f32.xlu0 %v1393
    %v1395 = vpop.xlane.xlu0 %1394
    %v1396 = vadd.f32 %v1304, %v1305
    %1397 = vadd.xlane.f32.xlu0 %v1396
    %v1398 = vpop.xlane.xlu0 %1397
    %v1399 = vadd.f32 %v1306, %v1307
    %1400 = vadd.xlane.f32.xlu0 %v1399
    %v1401 = vpop.xlane.xlu0 %1400
    %v1402 = vadd.f32 %v1308, %v1309
    %1403 = vadd.xlane.f32.xlu0 %v1402
    %v1404 = vpop.xlane.xlu0 %1403
    %v1405 = vadd.f32 %v1310, %v1311
    %1406 = vadd.xlane.f32.xlu0 %v1405
    %v1407 = vpop.xlane.xlu0 %1406
    %v1408 = vld [vmem:[%s3] sm:$0xff]
    %v1409 = vld [vmem:[%s3 + $0x8] sm:$0xff]
    %v1410 = vld [vmem:[%s3 + $0x10] sm:$0xff]
    %v1411 = vld [vmem:[%s3 + $0x18] sm:$0xff]
    %v1412 = vld [vmem:[%s4] sm:$0x1]
    %v1414 = vlaneseq
    %v1415 = vshrl.u32 %v1414, 7
    %v1416 = vsub.s32 0, %v1415
    %v1417 = vrot.slane %v1412, %v1416
    %v1451 = vlaneseq
    %v1452 = vand.u32 %v1451, 127
    %v1453 = vlaneseq
    %v1454 = vshrl.u32 %v1453, 7
    %v1455 = vsub.s32 %v1452, %v1454
    %v1456 = vrot.slane %v1314, %v1455
    %v1457 = vadd.s32 %v1452, 4294967288
    %v1458 = vlaneseq
    %v1459 = vshrl.u32 %v1458, 7
    %v1460 = vsub.s32 %v1457, %v1459
    %v1461 = vrot.slane %v1317, %v1460
    %vm1462 = vcmask 130112
    %v1463 = vsel %vm1462, %v1461, %v1456
    %v1464 = vadd.s32 %v1452, 4294967280
    %v1465 = vlaneseq
    %v1466 = vshrl.u32 %v1465, 7
    %v1467 = vsub.s32 %v1464, %v1466
    %v1468 = vrot.slane %v1320, %v1467
    %vm1469 = vcmask 195712
    %v1470 = vsel %vm1469, %v1468, %v1463
    %v1471 = vadd.s32 %v1452, 4294967272
    %v1472 = vlaneseq
    %v1473 = vshrl.u32 %v1472, 7
    %v1474 = vsub.s32 %v1471, %v1473
    %v1475 = vrot.slane %v1323, %v1474
    %vm1476 = vcmask 261312
    %v1477 = vsel %vm1476, %v1475, %v1470
    %v1478 = vlaneseq
    %v1479 = vshrl.u32 %v1478, 7
    %v1480 = vsub.s32 %v1452, %v1479
    %v1481 = vrot.slane %v1326, %v1480
    %v1482 = vlaneseq
    %v1483 = vshrl.u32 %v1482, 7
    %v1484 = vsub.s32 %v1457, %v1483
    %v1485 = vrot.slane %v1329, %v1484
    %v1486 = vsel %vm1462, %v1485, %v1481
    %v1487 = vlaneseq
    %v1488 = vshrl.u32 %v1487, 7
    %v1489 = vsub.s32 %v1464, %v1488
    %v1490 = vrot.slane %v1332, %v1489
    %v1491 = vsel %vm1469, %v1490, %v1486
    %v1492 = vlaneseq
    %v1493 = vshrl.u32 %v1492, 7
    %v1494 = vsub.s32 %v1471, %v1493
    %v1495 = vrot.slane %v1335, %v1494
    %v1496 = vsel %vm1476, %v1495, %v1491
    %v1497 = vlaneseq
    %v1498 = vshrl.u32 %v1497, 7
    %v1499 = vsub.s32 %v1452, %v1498
    %v1500 = vrot.slane %v1338, %v1499
    %v1501 = vlaneseq
    %v1502 = vshrl.u32 %v1501, 7
    %v1503 = vsub.s32 %v1457, %v1502
    %v1504 = vrot.slane %v1341, %v1503
    %v1505 = vsel %vm1462, %v1504, %v1500
    %v1506 = vlaneseq
    %v1507 = vshrl.u32 %v1506, 7
    %v1508 = vsub.s32 %v1464, %v1507
    %v1509 = vrot.slane %v1344, %v1508
    %v1510 = vsel %vm1469, %v1509, %v1505
    %v1511 = vlaneseq
    %v1512 = vshrl.u32 %v1511, 7
    %v1513 = vsub.s32 %v1471, %v1512
    %v1514 = vrot.slane %v1347, %v1513
    %v1515 = vsel %vm1476, %v1514, %v1510
    %v1516 = vlaneseq
    %v1517 = vshrl.u32 %v1516, 7
    %v1518 = vsub.s32 %v1452, %v1517
    %v1519 = vrot.slane %v1350, %v1518
    %v1520 = vlaneseq
    %v1521 = vshrl.u32 %v1520, 7
    %v1522 = vsub.s32 %v1457, %v1521
    %v1523 = vrot.slane %v1353, %v1522
    %v1524 = vsel %vm1462, %v1523, %v1519
    %v1525 = vlaneseq
    %v1526 = vshrl.u32 %v1525, 7
    %v1527 = vsub.s32 %v1464, %v1526
    %v1528 = vrot.slane %v1356, %v1527
    %v1529 = vsel %vm1469, %v1528, %v1524
    %v1530 = vlaneseq
    %v1531 = vshrl.u32 %v1530, 7
    %v1532 = vsub.s32 %v1471, %v1531
    %v1533 = vrot.slane %v1359, %v1532
    %v1534 = vsel %vm1476, %v1533, %v1529
    %v1535 = vlaneseq
    %v1536 = vshrl.u32 %v1535, 7
    %v1537 = vsub.s32 %v1452, %v1536
    %v1538 = vrot.slane %v1362, %v1537
    %v1539 = vlaneseq
    %v1540 = vshrl.u32 %v1539, 7
    %v1541 = vsub.s32 %v1457, %v1540
    %v1542 = vrot.slane %v1365, %v1541
    %v1543 = vsel %vm1462, %v1542, %v1538
    %v1544 = vlaneseq
    %v1545 = vshrl.u32 %v1544, 7
    %v1546 = vsub.s32 %v1464, %v1545
    %v1547 = vrot.slane %v1368, %v1546
    %v1548 = vsel %vm1469, %v1547, %v1543
    %v1549 = vlaneseq
    %v1550 = vshrl.u32 %v1549, 7
    %v1551 = vsub.s32 %v1471, %v1550
    %v1552 = vrot.slane %v1371, %v1551
    %v1553 = vsel %vm1476, %v1552, %v1548
    %v1554 = vlaneseq
    %v1555 = vshrl.u32 %v1554, 7
    %v1556 = vsub.s32 %v1452, %v1555
    %v1557 = vrot.slane %v1374, %v1556
    %v1558 = vlaneseq
    %v1559 = vshrl.u32 %v1558, 7
    %v1560 = vsub.s32 %v1457, %v1559
    %v1561 = vrot.slane %v1377, %v1560
    %v1562 = vsel %vm1462, %v1561, %v1557
    %v1563 = vlaneseq
    %v1564 = vshrl.u32 %v1563, 7
    %v1565 = vsub.s32 %v1464, %v1564
    %v1566 = vrot.slane %v1380, %v1565
    %v1567 = vsel %vm1469, %v1566, %v1562
    %v1568 = vlaneseq
    %v1569 = vshrl.u32 %v1568, 7
    %v1570 = vsub.s32 %v1471, %v1569
    %v1571 = vrot.slane %v1383, %v1570
    %v1572 = vsel %vm1476, %v1571, %v1567
    %v1573 = vlaneseq
    %v1574 = vshrl.u32 %v1573, 7
    %v1575 = vsub.s32 %v1452, %v1574
    %v1576 = vrot.slane %v1386, %v1575
    %v1577 = vlaneseq
    %v1578 = vshrl.u32 %v1577, 7
    %v1579 = vsub.s32 %v1457, %v1578
    %v1580 = vrot.slane %v1389, %v1579
    %v1581 = vsel %vm1462, %v1580, %v1576
    %v1582 = vlaneseq
    %v1583 = vshrl.u32 %v1582, 7
    %v1584 = vsub.s32 %v1464, %v1583
    %v1585 = vrot.slane %v1392, %v1584
    %v1586 = vsel %vm1469, %v1585, %v1581
    %v1587 = vlaneseq
    %v1588 = vshrl.u32 %v1587, 7
    %v1589 = vsub.s32 %v1471, %v1588
    %v1590 = vrot.slane %v1395, %v1589
    %v1591 = vsel %vm1476, %v1590, %v1586
    %v1592 = vlaneseq
    %v1593 = vshrl.u32 %v1592, 7
    %v1594 = vsub.s32 %v1452, %v1593
    %v1595 = vrot.slane %v1398, %v1594
    %v1596 = vlaneseq
    %v1597 = vshrl.u32 %v1596, 7
    %v1598 = vsub.s32 %v1457, %v1597
    %v1599 = vrot.slane %v1401, %v1598
    %v1600 = vsel %vm1462, %v1599, %v1595
    %v1601 = vlaneseq
    %v1602 = vshrl.u32 %v1601, 7
    %v1603 = vsub.s32 %v1464, %v1602
    %v1604 = vrot.slane %v1404, %v1603
    %v1605 = vsel %vm1469, %v1604, %v1600
    %v1606 = vlaneseq
    %v1607 = vshrl.u32 %v1606, 7
    %v1608 = vsub.s32 %v1471, %v1607
    %v1609 = vrot.slane %v1407, %v1608
    %v1610 = vsel %vm1476, %v1609, %v1605
    %vm1611 = vcmask 1041409
    %v1612 = vsel %vm1611, %v1496, %v1477
    %vm1613 = vcmask 1042434
    %v1614 = vsel %vm1613, %v1515, %v1612
    %vm1615 = vcmask 1043459
    %v1616 = vsel %vm1615, %v1534, %v1614
    %vm1617 = vcmask 1044484
    %v1618 = vsel %vm1617, %v1553, %v1616
    %vm1619 = vcmask 1045509
    %v1620 = vsel %vm1619, %v1572, %v1618
    %vm1621 = vcmask 1046534
    %v1622 = vsel %vm1621, %v1591, %v1620
    %vm1623 = vcmask 1047559
    %v1624 = vsel %vm1623, %v1610, %v1622
    %vm1625 = vcmask 261120
    %v1626 = vsel %vm1625, %v1624, 0
    %1628 = vmatprep.subr.mxu0 0.0
    %1629 = vmatpush1.msra.mxu0 0.0
    %1630 = vmatprep.subr.mxu0 0.0
    %1631 = vmatpush1.msra.mxu0 0.0
    %1632 = vmatprep.subr.mxu0 0.0
    %1633 = vmatpush1.msra.mxu0 0.0
    %1634 = vmatprep.subr.mxu0 0.0
    %1635 = vmatpush1.msra.mxu0 0.0
    %1636 = vmatprep.subr.mxu0 0.0
    %1637 = vmatpush1.msra.mxu0 0.0
    %1638 = vmatprep.subr.mxu0 0.0
    %1639 = vmatpush1.msra.mxu0 0.0
    %1640 = vmatprep.subr.mxu0 0.0
    %1641 = vmatpush1.msra.mxu0 0.0
    %1642 = vmatprep.subr.mxu0 0.0
    %1643 = vmatpush1.msra.mxu0 0.0
    %1644 = vmatprep.subr.mxu0 0.0
    %1645 = vmatpush1.msra.mxu0 0.0
    %1646 = vmatprep.subr.mxu0 0.0
    %1647 = vmatpush1.msra.mxu0 0.0
    %1648 = vmatprep.subr.mxu0 0.0
    %1649 = vmatpush1.msra.mxu0 0.0
    %1650 = vmatprep.subr.mxu0 0.0
    %1651 = vmatpush1.msra.mxu0 0.0
    %1652 = vmatprep.subr.mxu0 0.0
    %1653 = vmatpush1.msra.mxu0 %v1411
    %1654 = vmatprep.subr.mxu0 0.0
    %1655 = vmatpush1.msra.mxu0 %v1410
    %1656 = vmatprep.subr.mxu0 0.0
    %1657 = vmatpush1.msra.mxu0 %v1409
    %1658 = vmatprep.subr.mxu0 0.0
    %1659 = vmatpush1.msra.mxu0 %v1408
    %1660 = vmatprep.subr.mxu0 0.0
    %1661 = vmatpush2.msra.mxu0 0.0
    %1662 = vmatprep.subr.mxu0 0.0
    %1663 = vmatpush2.msra.mxu0 0.0
    %1664 = vmatprep.subr.mxu0 0.0
    %1665 = vmatpush2.msra.mxu0 0.0
    %1666 = vmatprep.subr.mxu0 0.0
    %1667 = vmatpush2.msra.mxu0 0.0
    %1668 = vmatprep.subr.mxu0 0.0
    %1669 = vmatpush2.msra.mxu0 0.0
    %1670 = vmatprep.subr.mxu0 0.0
    %1671 = vmatpush2.msra.mxu0 0.0
    %1672 = vmatprep.subr.mxu0 0.0
    %1673 = vmatpush2.msra.mxu0 0.0
    %1674 = vmatprep.subr.mxu0 0.0
    %1675 = vmatpush2.msra.mxu0 0.0
    %1676 = vmatprep.subr.mxu0 0.0
    %1677 = vmatpush2.msra.mxu0 0.0
    %1678 = vmatprep.subr.mxu0 0.0
    %1679 = vmatpush2.msra.mxu0 0.0
    %1680 = vmatprep.subr.mxu0 0.0
    %1681 = vmatpush2.msra.mxu0 0.0
    %1682 = vmatprep.subr.mxu0 0.0
    %1683 = vmatpush2.msra.mxu0 0.0
    %1684 = vmatprep.subr.mxu0 0.0
    %1685 = vmatpush2.msra.mxu0 0.0
    %1686 = vmatprep.subr.mxu0 0.0
    %1687 = vmatpush2.msra.mxu0 0.0
    %1688 = vmatprep.subr.mxu0 0.0
    %1689 = vmatpush2.msra.mxu0 0.0
    %1690 = vmatprep.subr.mxu0 0.0
    %1691 = vmatpush2.msra.mxu0 0.0
    %1692 = vmatprep.mubr.f32.mxu0 0.0
    %1693 = vmatmul.mubr.f32.gmra.mxu0 %v1626
    %v1694 = vpop.f32.mrf.mxu0
    %v1695 = vadd.f32 %v1417, %v1694
    %v1696 = vpop.f32.mrf.mxu0
    %1697 = vdwg.mxu0
    %v1698 = vxor.u32 %v1695, 2147483648
    %v1699 = vmul.f32 %v1698, 1.442695
    %v1700 = vpow.pop %v1699
    %v1701 = vadd.f32 %v1700, 1.0
    %v1702 = vrcp.pop %v1701
    %v1703 = vmul.f32 1.0, %v1702
    %vm1704 = vcmask 64512
    %1705 = vst.msk [vmem:[#allocation2] sm:$0xff] %vm1704, %v1703
    // Predicated region
    $region22: #{tpu_custom_call.1} parent=1 // pred_check
      _
    $region23: #{tpu_custom_call.1} parent=1 // pred_check_branch
      %1707 = sbr.rel (0) target = $region25
    $region24: #{tpu_custom_call.1} parent=1 // pred_region
      %s1709 = ssub.s32 128, 128
      %1710 = vsyncadd [#allocation3], %s1709
      %s1712 = sshll.u32 [#allocation2], 4
      %s1713 = int_to_ptr.vmem [resolvable:$true] %s1712
      %1715 = dma.vmem_to_hbm [thread:$0]  %s1713, 128, %s5, [#allocation3]
    $region25: #{tpu_custom_call.1} parent=1 // pred_fallthru
      _
    // Predicated region
    $region26: #{tpu_custom_call.1} parent=1 // pred_check
      _
    $region27: #{tpu_custom_call.1} parent=1 // pred_check_branch
      %1717 = sbr.rel (0) target = $region29
    $region28: #{tpu_custom_call.1} parent=1 // pred_region
      %1718 = dma.done [#allocation3], 128
    $region29: #{tpu_custom_call.1} parent=1 // pred_fallthru
      _
    %1719 = vsyncpa [#allocation3], 1

</llo_original>
